<compile_context>
chip_gen: v7x
topology: tpu7x:2x2x1
jax: 0.10.0
libtpu: 0.0.40
codegen_flags: <defaults>
</compile_context>

<pallas_src>
import functools

import jax
import jax.numpy as jnp
import numpy as np
from jax import lax
from jax.experimental import pallas as pl
from jax.experimental.pallas import tpu as pltpu


def sp_kernel(x_ref, w_ref, b_ref, o_ref, *, k):
    # Sparse linear layer: bf16 MXU matmul with f32 accumulation, plus bias.
    y = jnp.dot(x_ref[...], w_ref[...], preferred_element_type=jnp.float32)
    y = y + b_ref[...]                                     # [TB, N] f32

    if k <= 0:
        # Degenerate KWinners (k == 0): reference keeps everything.
        o_ref[...] = y.astype(o_ref.dtype)
        return

    n = y.shape[-1]
    col = lax.broadcasted_iota(jnp.int32, y.shape, 1)      # [TB, N] lane index

    # k-th largest value per row (counting multiplicity): k rounds of
    # "take the row max, then remove exactly one occurrence of it".
    # O(TB*N*k) work, no [TB, N, N] intermediate; ties handled exactly like
    # the sort-based reference (`y >= sort(y)[-k]`).
    def body(_, carry):
        cur, _ = carry
        m = jnp.max(cur, axis=-1, keepdims=True)                       # [TB, 1]
        first = jnp.min(jnp.where(cur == m, col, n), axis=-1,
                        keepdims=True)                                  # [TB, 1]
        cur = jnp.where(col == first, -jnp.inf, cur)
        return cur, m

    init = (y, jnp.zeros((y.shape[0], 1), jnp.float32))
    _, thresh = lax.fori_loop(0, k, body, init, unroll=True)

    # Keep y >= k-th largest (ties at the threshold are kept, matching the
    # reference's `y >= sort(y)[-k]` behaviour).
    o_ref[...] = jnp.where(y >= thresh, y, 0.0).astype(o_ref.dtype)


def sp_forward(x, w_t, b_row, k, *, tb=128):
    """x: [B, D] f32, w_t: [D, N] (W.T, already masked), b_row: [1, N] f32."""
    B, D = x.shape
    N = w_t.shape[1]
    tb = min(tb, B)
    k = max(0, min(int(k), N))

    # bf16 MXU inputs, f32 accumulation inside the kernel.
    x_lo = x.astype(jnp.bfloat16)
    w_lo = w_t.astype(jnp.bfloat16)
    b_f32 = b_row.astype(jnp.float32)

    # TODO(synk): the 95% weight sparsity is not exploited structurally here
    # (dense matmul); a packed nonzero-column format via scalar prefetch would
    # cut weight HBM bytes ~20x at large D*N.

    cost = pl.CostEstimate(
        flops=2 * B * D * N,
        transcendentals=0,
        bytes_accessed=(x_lo.size * 2 + w_lo.size * 2
                        + b_f32.size * 4 + B * N * 4),
    )

    return pl.pallas_call(
        functools.partial(sp_kernel, k=k),
        out_shape=jax.ShapeDtypeStruct((B, N), jnp.float32),
        grid_spec=pltpu.PrefetchScalarGridSpec(
            num_scalar_prefetch=0,
            grid=(pl.cdiv(B, tb),),
            in_specs=[
                pl.BlockSpec((tb, D), lambda i: (i, 0)),   # batch tile
                pl.BlockSpec((D, N), lambda i: (0, 0)),    # whole (masked) W.T, resident
                pl.BlockSpec((1, N), lambda i: (0, 0)),    # bias row, resident
            ],
            out_specs=pl.BlockSpec((tb, N), lambda i: (i, 0)),
        ),
        compiler_params=pltpu.CompilerParams(
            dimension_semantics=("parallel",),             # megacore on v7x
            vmem_limit_bytes=32 * 1024 * 1024),
        cost_estimate=cost,
    )(x_lo, w_lo, b_f32)


def init_sp_params(key, input_size, output_size, weight_sparsity):
    """Deterministic synthetic init mirroring nn.Linear init + SparseWeights mask."""
    kw, kb, km = jax.random.split(key, 3)
    bound = 1.0 / np.sqrt(input_size)
    w = jax.random.uniform(kw, (output_size, input_size), jnp.float32, -bound, bound)
    b = jax.random.uniform(kb, (output_size,), jnp.float32, -bound, bound)

    # SparseWeights: zero round(sparsity * fan_in) weights per output unit.
    num_zeros = int(round(weight_sparsity * input_size))
    scores = jax.random.uniform(km, (output_size, input_size))
    ranks = jnp.argsort(jnp.argsort(scores, axis=1), axis=1)   # random per-row ranks
    mask = (ranks >= num_zeros).astype(jnp.float32)
    return w * mask, b


def sp_reference(x, w, b, k):
    """Pure-JAX reference of the PyTorch forward (same bf16 matmul inputs)."""
    y = jnp.dot(x.astype(jnp.bfloat16), w.astype(jnp.bfloat16).T,
                preferred_element_type=jnp.float32) + b
    if k <= 0:
        return y
    thresh = jnp.sort(y, axis=-1)[:, -k][:, None]
    return jnp.where(y >= thresh, y, 0.0)


if __name__ == "__main__":
    # Shapes consistent with the module; B=256 / tb=128 gives a 2-step
    # parallel grid (both TensorCores on v7x) and fills the MXU rows.
    B = 256
    input_size = 128
    output_size = 128
    kw_percent_on = 0.05
    weight_sparsity = 0.95
    # KWinners: k = round(percent_on * n); k_inference_factor = 1.0 -> same k at eval.
    k = int(round(output_size * kw_percent_on))
    # TODO(synk): KWinners' training-time duty-cycle/boost state update is
    # stateful and has no effect on the forward output when boost_strength == 0,
    # so it is omitted.

    key = jax.random.PRNGKey(0)
    kp, kx = jax.random.split(key)
    w, b = init_sp_params(kp, input_size, output_size, weight_sparsity)
    x = jax.random.normal(kx, (B, input_size), jnp.float32)

    out = sp_forward(x, jnp.asarray(w.T), b.reshape(1, -1), k, tb=128)
    out = jax.block_until_ready(out)

    ref = sp_reference(x, w, b, k)
    assert out.shape == (B, output_size)
    assert jnp.allclose(out, ref, atol=1e-3, rtol=1e-3), "mismatch vs reference"
    # Sanity: each row keeps roughly k active units (ties may add a few).
    active = (out != 0.0).sum(axis=-1)
    assert int(active.min()) >= 1 and int(active.max()) <= output_size
    print("KERNEL_OK")
</pallas_src>

<mosaic_0001>
module attributes {stable_mosaic.version = 11 : i64} {
  func.func @sp_kernel(%arg0: i32, %arg1: memref<128x128xbf16, #tpu.memory_space<vmem>>, %arg2: memref<128x128xbf16, #tpu.memory_space<vmem>>, %arg3: memref<1x128xf32, #tpu.memory_space<vmem>>, %arg4: memref<128x128xf32, #tpu.memory_space<vmem>>) attributes {dimension_semantics = [#tpu.dimension_semantics<parallel>], iteration_bounds = array<i64: 2>, scalar_prefetch = 0 : i64, scratch_operands = 0 : i64, tpu.core_type = #tpu.core_type<tc>, window_params = [{transform_indices = @transform_0, window_bounds = array<i64: 128, 128>}, {pipeline_mode = #tpu.pipeline_mode<synchronous>, transform_indices = @transform_1, window_bounds = array<i64: 128, 128>}, {pipeline_mode = #tpu.pipeline_mode<synchronous>, transform_indices = @transform_2, window_bounds = array<i64: 1, 128>}, {transform_indices = @transform_3, window_bounds = array<i64: 128, 128>}]} {
    %c0 = arith.constant 0 : index
    %c0_0 = arith.constant 0 : index
    %0 = vector.load %arg1[%c0, %c0_0] : memref<128x128xbf16, #tpu.memory_space<vmem>>, vector<128x128xbf16>
    %c0_1 = arith.constant 0 : index
    %c0_2 = arith.constant 0 : index
    %1 = vector.load %arg2[%c0_1, %c0_2] : memref<128x128xbf16, #tpu.memory_space<vmem>>, vector<128x128xbf16>
    %cst = arith.constant dense<0.000000e+00> : vector<128x128xf32>
    %2 = tpu.matmul %0, %1, %cst {dimension_numbers = #tpu.dot_dimension_numbers<[1], [0], [0], [1], [0, 0, 1, 1], [], []>} : vector<128x128xbf16>, vector<128x128xbf16>, vector<128x128xf32> -> vector<128x128xf32>
    %c0_3 = arith.constant 0 : index
    %c0_4 = arith.constant 0 : index
    %3 = vector.load %arg3[%c0_3, %c0_4] : memref<1x128xf32, #tpu.memory_space<vmem>>, vector<1x128xf32>
    %4 = vector.broadcast %3 : vector<1x128xf32> to vector<128x128xf32>
    %5 = arith.addf %2, %4 : vector<128x128xf32>
    %6 = tpu.iota {dimensions = array<i32: 1>} : vector<128x128xi32>
    %cst_5 = arith.constant 0.000000e+00 : f32
    %7 = vector.broadcast %cst_5 : f32 to vector<128x1xf32>
    %c0_i32 = arith.constant 0 : i32
    %cst_6 = arith.constant dense<0xFF800000> : vector<128xf32>
    %8 = vector.multi_reduction <maximumf>, %5, %cst_6 [1] : vector<128x128xf32> to vector<128xf32>
    %9 = vector.shape_cast %8 : vector<128xf32> to vector<128x1xf32>
    %10 = vector.broadcast %9 : vector<128x1xf32> to vector<128x128xf32>
    %11 = arith.cmpf oeq, %5, %10 : vector<128x128xf32>
    %c128_i32 = arith.constant 128 : i32
    %12 = vector.broadcast %c128_i32 : i32 to vector<128x128xi32>
    %13 = arith.select %11, %6, %12 : vector<128x128xi1>, vector<128x128xi32>
    %cst_7 = arith.constant dense<2147483647> : vector<128xi32>
    %14 = vector.multi_reduction <minsi>, %13, %cst_7 [1] : vector<128x128xi32> to vector<128xi32>
    %15 = vector.shape_cast %14 : vector<128xi32> to vector<128x1xi32>
    %16 = vector.broadcast %15 : vector<128x1xi32> to vector<128x128xi32>
    %17 = arith.cmpi eq, %6, %16 : vector<128x128xi32>
    %cst_8 = arith.constant 0xFF800000 : f32
    %18 = vector.broadcast %cst_8 : f32 to vector<128x128xf32>
    %19 = arith.select %17, %18, %5 : vector<128x128xi1>, vector<128x128xf32>
    %c1_i32 = arith.constant 1 : i32
    %cst_9 = arith.constant dense<0xFF800000> : vector<128xf32>
    %20 = vector.multi_reduction <maximumf>, %19, %cst_9 [1] : vector<128x128xf32> to vector<128xf32>
    %21 = vector.shape_cast %20 : vector<128xf32> to vector<128x1xf32>
    %22 = vector.broadcast %21 : vector<128x1xf32> to vector<128x128xf32>
    %23 = arith.cmpf oeq, %19, %22 : vector<128x128xf32>
    %c128_i32_10 = arith.constant 128 : i32
    %24 = vector.broadcast %c128_i32_10 : i32 to vector<128x128xi32>
    %25 = arith.select %23, %6, %24 : vector<128x128xi1>, vector<128x128xi32>
    %cst_11 = arith.constant dense<2147483647> : vector<128xi32>
    %26 = vector.multi_reduction <minsi>, %25, %cst_11 [1] : vector<128x128xi32> to vector<128xi32>
    %27 = vector.shape_cast %26 : vector<128xi32> to vector<128x1xi32>
    %28 = vector.broadcast %27 : vector<128x1xi32> to vector<128x128xi32>
    %29 = arith.cmpi eq, %6, %28 : vector<128x128xi32>
    %cst_12 = arith.constant 0xFF800000 : f32
    %30 = vector.broadcast %cst_12 : f32 to vector<128x128xf32>
    %31 = arith.select %29, %30, %19 : vector<128x128xi1>, vector<128x128xf32>
    %c2_i32 = arith.constant 2 : i32
    %cst_13 = arith.constant dense<0xFF800000> : vector<128xf32>
    %32 = vector.multi_reduction <maximumf>, %31, %cst_13 [1] : vector<128x128xf32> to vector<128xf32>
    %33 = vector.shape_cast %32 : vector<128xf32> to vector<128x1xf32>
    %34 = vector.broadcast %33 : vector<128x1xf32> to vector<128x128xf32>
    %35 = arith.cmpf oeq, %31, %34 : vector<128x128xf32>
    %c128_i32_14 = arith.constant 128 : i32
    %36 = vector.broadcast %c128_i32_14 : i32 to vector<128x128xi32>
    %37 = arith.select %35, %6, %36 : vector<128x128xi1>, vector<128x128xi32>
    %cst_15 = arith.constant dense<2147483647> : vector<128xi32>
    %38 = vector.multi_reduction <minsi>, %37, %cst_15 [1] : vector<128x128xi32> to vector<128xi32>
    %39 = vector.shape_cast %38 : vector<128xi32> to vector<128x1xi32>
    %40 = vector.broadcast %39 : vector<128x1xi32> to vector<128x128xi32>
    %41 = arith.cmpi eq, %6, %40 : vector<128x128xi32>
    %cst_16 = arith.constant 0xFF800000 : f32
    %42 = vector.broadcast %cst_16 : f32 to vector<128x128xf32>
    %43 = arith.select %41, %42, %31 : vector<128x128xi1>, vector<128x128xf32>
    %c3_i32 = arith.constant 3 : i32
    %cst_17 = arith.constant dense<0xFF800000> : vector<128xf32>
    %44 = vector.multi_reduction <maximumf>, %43, %cst_17 [1] : vector<128x128xf32> to vector<128xf32>
    %45 = vector.shape_cast %44 : vector<128xf32> to vector<128x1xf32>
    %46 = vector.broadcast %45 : vector<128x1xf32> to vector<128x128xf32>
    %47 = arith.cmpf oeq, %43, %46 : vector<128x128xf32>
    %c128_i32_18 = arith.constant 128 : i32
    %48 = vector.broadcast %c128_i32_18 : i32 to vector<128x128xi32>
    %49 = arith.select %47, %6, %48 : vector<128x128xi1>, vector<128x128xi32>
    %cst_19 = arith.constant dense<2147483647> : vector<128xi32>
    %50 = vector.multi_reduction <minsi>, %49, %cst_19 [1] : vector<128x128xi32> to vector<128xi32>
    %51 = vector.shape_cast %50 : vector<128xi32> to vector<128x1xi32>
    %52 = vector.broadcast %51 : vector<128x1xi32> to vector<128x128xi32>
    %53 = arith.cmpi eq, %6, %52 : vector<128x128xi32>
    %cst_20 = arith.constant 0xFF800000 : f32
    %54 = vector.broadcast %cst_20 : f32 to vector<128x128xf32>
    %55 = arith.select %53, %54, %43 : vector<128x128xi1>, vector<128x128xf32>
    %c4_i32 = arith.constant 4 : i32
    %cst_21 = arith.constant dense<0xFF800000> : vector<128xf32>
    %56 = vector.multi_reduction <maximumf>, %55, %cst_21 [1] : vector<128x128xf32> to vector<128xf32>
    %57 = vector.shape_cast %56 : vector<128xf32> to vector<128x1xf32>
    %58 = vector.broadcast %57 : vector<128x1xf32> to vector<128x128xf32>
    %59 = arith.cmpf oeq, %55, %58 : vector<128x128xf32>
    %c128_i32_22 = arith.constant 128 : i32
    %60 = vector.broadcast %c128_i32_22 : i32 to vector<128x128xi32>
    %61 = arith.select %59, %6, %60 : vector<128x128xi1>, vector<128x128xi32>
    %cst_23 = arith.constant dense<2147483647> : vector<128xi32>
    %62 = vector.multi_reduction <minsi>, %61, %cst_23 [1] : vector<128x128xi32> to vector<128xi32>
    %63 = vector.shape_cast %62 : vector<128xi32> to vector<128x1xi32>
    %64 = vector.broadcast %63 : vector<128x1xi32> to vector<128x128xi32>
    %65 = arith.cmpi eq, %6, %64 : vector<128x128xi32>
    %cst_24 = arith.constant 0xFF800000 : f32
    %66 = vector.broadcast %cst_24 : f32 to vector<128x128xf32>
    %67 = arith.select %65, %66, %55 : vector<128x128xi1>, vector<128x128xf32>
    %c5_i32 = arith.constant 5 : i32
    %cst_25 = arith.constant dense<0xFF800000> : vector<128xf32>
    %68 = vector.multi_reduction <maximumf>, %67, %cst_25 [1] : vector<128x128xf32> to vector<128xf32>
    %69 = vector.shape_cast %68 : vector<128xf32> to vector<128x1xf32>
    %70 = vector.broadcast %69 : vector<128x1xf32> to vector<128x128xf32>
    %71 = arith.cmpf oeq, %67, %70 : vector<128x128xf32>
    %c128_i32_26 = arith.constant 128 : i32
    %72 = vector.broadcast %c128_i32_26 : i32 to vector<128x128xi32>
    %73 = arith.select %71, %6, %72 : vector<128x128xi1>, vector<128x128xi32>
    %cst_27 = arith.constant dense<2147483647> : vector<128xi32>
    %74 = vector.multi_reduction <minsi>, %73, %cst_27 [1] : vector<128x128xi32> to vector<128xi32>
    %75 = vector.shape_cast %74 : vector<128xi32> to vector<128x1xi32>
    %76 = vector.broadcast %75 : vector<128x1xi32> to vector<128x128xi32>
    %77 = arith.cmpi eq, %6, %76 : vector<128x128xi32>
    %cst_28 = arith.constant 0xFF800000 : f32
    %78 = vector.broadcast %cst_28 : f32 to vector<128x128xf32>
    %79 = arith.select %77, %78, %67 : vector<128x128xi1>, vector<128x128xf32>
    %80 = vector.broadcast %69 : vector<128x1xf32> to vector<128x128xf32>
    %81 = arith.cmpf oge, %5, %80 : vector<128x128xf32>
    %cst_29 = arith.constant 0.000000e+00 : f32
    %82 = vector.broadcast %cst_29 : f32 to vector<128x128xf32>
    %83 = arith.select %81, %5, %82 : vector<128x128xi1>, vector<128x128xf32>
    %c0_30 = arith.constant 0 : index
    %c0_31 = arith.constant 0 : index
    %84 = vector.load %arg4[%c0_30, %c0_31] : memref<128x128xf32, #tpu.memory_space<vmem>>, vector<128x128xf32>
    tpu.vector_store %arg4[%c0_30, %c0_31], %83 {strides = array<i32>} : memref<128x128xf32, #tpu.memory_space<vmem>>, vector<128x128xf32>,
    return
  }
  func.func @transform_0(%arg0: i32) -> (i32, i32) {
    %c0_i32 = arith.constant 0 : i32
    %c0_i32_0 = arith.constant 0 : i32
    return %arg0, %c0_i32 : i32, i32
  }
  func.func @transform_1(%arg0: i32) -> (i32, i32) {
    %c0_i32 = arith.constant 0 : i32
    %c0_i32_0 = arith.constant 0 : i32
    %c0_i32_1 = arith.constant 0 : i32
    return %c0_i32, %c0_i32_0 : i32, i32
  }
  func.func @transform_2(%arg0: i32) -> (i32, i32) {
    %c0_i32 = arith.constant 0 : i32
    %c0_i32_0 = arith.constant 0 : i32
    %c0_i32_1 = arith.constant 0 : i32
    return %c0_i32, %c0_i32_0 : i32, i32
  }
  func.func @transform_3(%arg0: i32) -> (i32, i32) {
    %c0_i32 = arith.constant 0 : i32
    %c0_i32_0 = arith.constant 0 : i32
    return %arg0, %c0_i32 : i32, i32
  }
}

</mosaic_0001>

<llo_original>
// kernel: tpu_custom_call.1
$region0: #{tpu_custom_call.1}
  #allocation0 [shape = 'u32[]', space=smem, size = 0x4, offset = 0x4, fixed_abs, tag = 'smem constant byte address 0x4 - core index']
  #allocation1 [shape = 'u32[144,128]{1,0:T(1,128)}', space=vmem, size = 0x12000, scoped, tag = 'internal scratch']
  %s0 = inlined_call_operand.hbm [shape: bf16[256,128], index: 0, kind: input, shape index: {}]
  %s1 = inlined_call_operand.hbm [shape: bf16[128,128], index: 1, kind: input, shape index: {}]
  %s2 = inlined_call_operand.vmem [shape: f32[1,128], index: 2, kind: input, shape index: {}]
  %s3 = inlined_call_operand.hbm [shape: f32[256,128], index: 3, kind: output, shape index: {}]
  %s4 = sld [smem:[#allocation0]]
  $region53: #{tpu_custom_call.1} parent=0
    _
  %s6 = ssub.s32 1, %s4
  %s7 = scalar_select 0, %s6, %s4
  $region1: #{tpu_custom_call.1} parent=0
    #allocation2 [shape = 'u8[65536]{0}', space=vmem, size = 0x10000, scoped, tag = 'input window, operand 0']
    #allocation3 [shape = 's32[2]{0}', space=sflag, size = 0x8, scoped, tag = 'scoped memory for tpu_custom_call.1']
    #allocation4 [shape = 's32[2]{0}', space=sflag, size = 0x8, scoped, tag = 'scoped memory for tpu_custom_call.1']
    #allocation5 [shape = 'u8[32768]{0}', space=vmem, size = 0x8000, scoped, tag = 'input window, operand 1, single buffered']
    #allocation6 [shape = 's32[1]{0}', space=sflag, size = 0x4, scoped, tag = 'scoped memory for tpu_custom_call.1']
    #allocation7 [shape = 'u8[131072]{0}', space=vmem, size = 0x20000, scoped, tag = 'output window, operand 0']
    %8 = vsyncpa [#allocation3], 0
    %s9 = scalar_lea.sflag [#allocation3], 1
    %10 = vsyncpa %s9, 0
    %11 = vsyncpa [#allocation6], 0
    %12 = vsyncpa [#allocation4], 0
    %s13 = scalar_lea.sflag [#allocation4], 1
    %14 = vsyncpa %s13, 0
    loop: start=0, step=1, limit=4
    $region2: #{tpu_custom_call.1} parent=1 // loop_pre_header
      _
    $region3: #{tpu_custom_call.1} parent=1 // loop_header
      %s16 = sphi 0, %s20
      %p17 = scmp.ge.s32.totalorder %s16, 4
      %s26 = sphi 0, %s28
      %s29 = sphi 0, %s26
      %s30 = sphi 0, %s29
      %s46 = sphi 0, %s30
      %s50 = sphi 0, %s50
      %s52 = sphi 0, %s50
      %s53 = sphi 0, %s52
      %s67 = sphi 0, %s53
      %s71 = sphi 0, %s71
      %s73 = sphi 0, %s71
      %s74 = sphi 0, %s73
      %s88 = sphi 0, %s74
      %s94 = sphi 0, %s96
      %s97 = sphi 0, %s94
      %s98 = sphi 0, %s97
      %s114 = sphi 0, %s98
    $region4: #{tpu_custom_call.1} parent=1 // loop_header_branch
      %19 = sbr.rel (%p17) target = $region8
    $region5: #{tpu_custom_call.1} parent=1 // loop_body
      %s21 = ssub.s32 %s16, 1
      %s22 = ssub.s32 %s16, 2
      %s23 = sadd.s32 %s16, 1
      %s24 = ssub.s32 %s16, %s23
      %p25 = scmp.eq.s32.totalorder %s24, 0
      %s27 = sadd.s32 %s26, 1
      %s28 = scalar_select %p25, %s26, %s27
      %p31 = pneg %p25
      %p32 = scmp.eq.s32.totalorder %s16, 1
      %p33 = por %p31, %p32
      %p34 = scmp.ne.s32.totalorder %s26, %s29
      %p35 = scmp.eq.s32.totalorder %s16, 0
      %p36 = por %p34, %p35
      %p37 = scmp.ne.s32.totalorder %s26, %s29
      %p38 = scmp.eq.s32.totalorder %s21, 1
      %p39 = por %p37, %p38
      %p40 = scmp.ne.s32.totalorder %s29, %s30
      %p41 = scmp.eq.s32.totalorder %s21, 0
      %p42 = por %p40, %p41
      %p43 = scmp.ne.s32.totalorder %s29, %s30
      %p44 = scmp.eq.s32.totalorder %s22, 1
      %p45 = por %p43, %p44
      %p47 = scmp.ne.s32.totalorder %s30, %s46
      %p48 = scmp.eq.s32.totalorder %s22, 0
      %p49 = por %p47, %p48
      %s51 = sadd.s32 %s50, 1
      %p54 = scmp.eq.s32.totalorder %s16, 1
      %p55 = scmp.ne.s32.totalorder %s50, %s52
      %p56 = scmp.eq.s32.totalorder %s16, 0
      %p57 = por %p55, %p56
      %p58 = scmp.ne.s32.totalorder %s50, %s52
      %p59 = scmp.eq.s32.totalorder %s21, 1
      %p60 = por %p58, %p59
      %p61 = scmp.ne.s32.totalorder %s52, %s53
      %p62 = scmp.eq.s32.totalorder %s21, 0
      %p63 = por %p61, %p62
      %p64 = scmp.ne.s32.totalorder %s52, %s53
      %p65 = scmp.eq.s32.totalorder %s22, 1
      %p66 = por %p64, %p65
      %p68 = scmp.ne.s32.totalorder %s53, %s67
      %p69 = scmp.eq.s32.totalorder %s22, 0
      %p70 = por %p68, %p69
      %s72 = sadd.s32 %s71, 1
      %p75 = scmp.eq.s32.totalorder %s16, 1
      %p76 = scmp.ne.s32.totalorder %s71, %s73
      %p77 = scmp.eq.s32.totalorder %s16, 0
      %p78 = por %p76, %p77
      %p79 = scmp.ne.s32.totalorder %s71, %s73
      %p80 = scmp.eq.s32.totalorder %s21, 1
      %p81 = por %p79, %p80
      %p82 = scmp.ne.s32.totalorder %s73, %s74
      %p83 = scmp.eq.s32.totalorder %s21, 0
      %p84 = por %p82, %p83
      %p85 = scmp.ne.s32.totalorder %s73, %s74
      %p86 = scmp.eq.s32.totalorder %s22, 1
      %p87 = por %p85, %p86
      %p89 = scmp.ne.s32.totalorder %s74, %s88
      %p90 = scmp.eq.s32.totalorder %s22, 0
      %p91 = por %p89, %p90
      %s92 = ssub.s32 %s16, %s23
      %p93 = scmp.eq.s32.totalorder %s92, 0
      %s95 = sadd.s32 %s94, 1
      %s96 = scalar_select %p93, %s94, %s95
      %p99 = pneg %p93
      %p100 = scmp.eq.s32.totalorder %s16, 1
      %p101 = por %p99, %p100
      %p102 = scmp.ne.s32.totalorder %s94, %s97
      %p103 = scmp.eq.s32.totalorder %s16, 0
      %p104 = por %p102, %p103
      %p105 = scmp.ne.s32.totalorder %s94, %s97
      %p106 = scmp.eq.s32.totalorder %s21, 1
      %p107 = por %p105, %p106
      %p108 = scmp.ne.s32.totalorder %s97, %s98
      %p109 = scmp.eq.s32.totalorder %s21, 0
      %p110 = por %p108, %p109
      %p111 = scmp.ne.s32.totalorder %s97, %s98
      %p112 = scmp.eq.s32.totalorder %s22, 1
      %p113 = por %p111, %p112
      %p115 = scmp.ne.s32.totalorder %s98, %s114
      %p116 = scmp.eq.s32.totalorder %s22, 0
      %p117 = por %p115, %p116
      %p118 = scmp.le.s32.totalorder 1, %s16
      %p119 = scmp.lt.s32.totalorder %s16, 3
      %p120 = pnand %p118, %p119
      %p121 = pneg %p120
      // Predicated region
      $region9: #{tpu_custom_call.1} parent=5 // pred_check
        _
      $region10: #{tpu_custom_call.1} parent=5 // pred_check_branch
        %123 = sbr.rel (%p120) target = $region12
      $region11: #{tpu_custom_call.1} parent=5 // pred_region
        %s124 = ssub.s32 %s16, 1
        // Predicated region
        $region13: #{tpu_custom_call.1} parent=11 // pred_check
          %p125 = pneg %p63
        $region14: #{tpu_custom_call.1} parent=11 // pred_check_branch
          %127 = sbr.rel (%p125) target = $region16
        $region15: #{tpu_custom_call.1} parent=11 // pred_region
          %s129 = ssub.s32 1024, 1024
          %130 = vsyncadd [#allocation6], %s129
          %s131 = sshll.u32 [#allocation5], 4
          %s132 = int_to_ptr.vmem [resolvable:$true] %s131
          %137 = dma.hbm_to_vmem [thread:$0]  %s1, 1024, %s132, [#allocation6], 64, 64, 4
        $region16: #{tpu_custom_call.1} parent=11 // pred_fallthru
          _
        // Predicated region
        $region17: #{tpu_custom_call.1} parent=11 // pred_check
          %p138 = pneg %p84
        $region18: #{tpu_custom_call.1} parent=11 // pred_check_branch
          %140 = sbr.rel (%p138) target = $region20
        $region19: #{tpu_custom_call.1} parent=11 // pred_region
          _
        $region20: #{tpu_custom_call.1} parent=11 // pred_fallthru
          _
      $region12: #{tpu_custom_call.1} parent=5 // pred_fallthru
        _
      %p141 = scmp.lt.s32.totalorder %s16, 2
      // Predicated region
      $region21: #{tpu_custom_call.1} parent=5 // pred_check
        %p142 = pneg %p141
      $region22: #{tpu_custom_call.1} parent=5 // pred_check_branch
        %144 = sbr.rel (%p142) target = $region24
      $region23: #{tpu_custom_call.1} parent=5 // pred_region
        // Predicated region
        $region25: #{tpu_custom_call.1} parent=23 // pred_check
          %p145 = pneg %p36
        $region26: #{tpu_custom_call.1} parent=23 // pred_check_branch
          %147 = sbr.rel (%p145) target = $region28
        $region27: #{tpu_custom_call.1} parent=23 // pred_region
          %s148 = sand.u32 %s26, 1
          %s149 = scalar_lea.sflag [#allocation3], %s148
          %s150 = sand.u32 %s26, 1
          %s151 = smul.addr %s150, 64
          %s152 = scalar_lea.vmem [#allocation2], %s151
          %s153 = smul.u32 16, %s16
          %s155 = ssub.s32 1024, 1024
          %156 = vsyncadd %s149, %s155
          %s157 = smul.addr %s153, 64
          %s158 = scalar_lea.hbm %s0, %s157
          %s159 = sshll.u32 %s152, 4
          %s160 = int_to_ptr.vmem [resolvable:$true] %s159
          %165 = dma.hbm_to_vmem [thread:$0]  %s158, 1024, %s160, %s149, 64, 64, 4
        $region28: #{tpu_custom_call.1} parent=23 // pred_fallthru
          _
      $region24: #{tpu_custom_call.1} parent=5 // pred_fallthru
        _
      %p166 = scmp.le.s32.totalorder 1, %s16
      %p167 = scmp.lt.s32.totalorder %s16, 3
      %p168 = pnand %p166, %p167
      %p169 = pneg %p168
      // Predicated region
      $region29: #{tpu_custom_call.1} parent=5 // pred_check
        _
      $region30: #{tpu_custom_call.1} parent=5 // pred_check_branch
        %171 = sbr.rel (%p168) target = $region32
      $region31: #{tpu_custom_call.1} parent=5 // pred_region
        %s172 = ssub.s32 %s16, 1
        %s173 = sand.u32 %s29, 1
        %s174 = scalar_lea.sflag [#allocation3], %s173
        %s175 = sand.u32 %s29, 1
        %s176 = smul.addr %s175, 64
        %s177 = scalar_lea.vmem [#allocation2], %s176
        // Predicated region
        $region33: #{tpu_custom_call.1} parent=31 // pred_check
          %p178 = pneg %p42
        $region34: #{tpu_custom_call.1} parent=31 // pred_check_branch
          %180 = sbr.rel (%p178) target = $region36
        $region35: #{tpu_custom_call.1} parent=31 // pred_region
          %181 = dma.done %s174, 1024
        $region36: #{tpu_custom_call.1} parent=31 // pred_fallthru
          _
        // Predicated region
        $region37: #{tpu_custom_call.1} parent=31 // pred_check
          %p182 = pneg %p63
        $region38: #{tpu_custom_call.1} parent=31 // pred_check_branch
          %184 = sbr.rel (%p182) target = $region40
        $region39: #{tpu_custom_call.1} parent=31 // pred_region
          %185 = dma.done [#allocation6], 1024
        $region40: #{tpu_custom_call.1} parent=31 // pred_fallthru
          _
        %s186 = sand.u32 %s29, 1
        %s187 = scalar_lea.sflag [#allocation3], %s186
        %s188 = sand.u32 %s29, 1
        %s189 = smul.addr %s188, 64
        %s190 = scalar_lea.vmem [#allocation2], %s189
        %p191 = pneg %p42
        %p192 = pneg %p39
        %p193 = pneg %p63
        %p194 = pneg %p60
        %p195 = pneg %p84
        %p196 = pneg %p81
        %p197 = pneg %p110
        %p198 = pneg %p107
        %s199 = sand.u32 %s97, 1
        %s200 = scalar_lea.sflag [#allocation4], %s199
        %s201 = sand.u32 %s97, 1
        %s202 = smul.addr %s201, 128
        %s203 = scalar_lea.vmem [#allocation7], %s202
        %s204 = smul.u32 16, %s21
        %s205 = smul.u32 16, %s21
        %v207 = vld [vmem:[%s177] sm:$0xf]
        %v208 = vld [vmem:[%s177 + $0x4] sm:$0xf]
        %v209 = vld [vmem:[%s177 + $0x8] sm:$0xf]
        %v210 = vld [vmem:[%s177 + $0xc] sm:$0xf]
        %v211 = vld [vmem:[%s177 + $0x10] sm:$0xf]
        %v212 = vld [vmem:[%s177 + $0x14] sm:$0xf]
        %v213 = vld [vmem:[%s177 + $0x18] sm:$0xf]
        %v214 = vld [vmem:[%s177 + $0x1c] sm:$0xf]
        %v215 = vld [vmem:[%s177 + $0x20] sm:$0xf]
        %v216 = vld [vmem:[%s177 + $0x24] sm:$0xf]
        %v217 = vld [vmem:[%s177 + $0x28] sm:$0xf]
        %v218 = vld [vmem:[%s177 + $0x2c] sm:$0xf]
        %v219 = vld [vmem:[%s177 + $0x30] sm:$0xf]
        %v220 = vld [vmem:[%s177 + $0x34] sm:$0xf]
        %v221 = vld [vmem:[%s177 + $0x38] sm:$0xf]
        %v222 = vld [vmem:[%s177 + $0x3c] sm:$0xf]
        %v223 = vld [vmem:[#allocation5] sm:$0xf]
        %v224 = vld [vmem:[#allocation5 + $0x4] sm:$0xf]
        %v225 = vld [vmem:[#allocation5 + $0x8] sm:$0xf]
        %v226 = vld [vmem:[#allocation5 + $0xc] sm:$0xf]
        %v227 = vld [vmem:[#allocation5 + $0x10] sm:$0xf]
        %v228 = vld [vmem:[#allocation5 + $0x14] sm:$0xf]
        %v229 = vld [vmem:[#allocation5 + $0x18] sm:$0xf]
        %v230 = vld [vmem:[#allocation5 + $0x1c] sm:$0xf]
        %v231 = vld [vmem:[#allocation5 + $0x20] sm:$0xf]
        %v232 = vld [vmem:[#allocation5 + $0x24] sm:$0xf]
        %v233 = vld [vmem:[#allocation5 + $0x28] sm:$0xf]
        %v234 = vld [vmem:[#allocation5 + $0x2c] sm:$0xf]
        %v235 = vld [vmem:[#allocation5 + $0x30] sm:$0xf]
        %v236 = vld [vmem:[#allocation5 + $0x34] sm:$0xf]
        %v237 = vld [vmem:[#allocation5 + $0x38] sm:$0xf]
        %v238 = vld [vmem:[#allocation5 + $0x3c] sm:$0xf]
        %v239 = vld [vmem:[%s2] sm:$0x1]
        %v241 = vlaneseq
        %v242 = vshrl.u32 %v241, 7
        %v243 = vsub.s32 0, %v242
        %v244 = vrot.slane %v239, %v243
        %v262 = vunpack.c.l.b16 %v207
        %v263 = vunpack.c.l.b16 %v208
        %v264 = vunpack.c.l.b16 %v209
        %v265 = vunpack.c.l.b16 %v210
        %v266 = vunpack.c.l.b16 %v211
        %v267 = vunpack.c.l.b16 %v212
        %v268 = vunpack.c.l.b16 %v213
        %v269 = vunpack.c.l.b16 %v214
        %v270 = vunpack.c.l.b16 %v215
        %v271 = vunpack.c.l.b16 %v216
        %v272 = vunpack.c.l.b16 %v217
        %v273 = vunpack.c.l.b16 %v218
        %v274 = vunpack.c.l.b16 %v219
        %v275 = vunpack.c.l.b16 %v220
        %v276 = vunpack.c.l.b16 %v221
        %v277 = vunpack.c.l.b16 %v222
        %v278 = vpack.c.b16 %v263, %v262
        %v279 = vpack.c.b16 %v265, %v264
        %v280 = vpack.c.b16 %v267, %v266
        %v281 = vpack.c.b16 %v269, %v268
        %v282 = vpack.c.b16 %v271, %v270
        %v283 = vpack.c.b16 %v273, %v272
        %v284 = vpack.c.b16 %v275, %v274
        %v285 = vpack.c.b16 %v277, %v276
        %v310 = vunpack.c.l.b16 %v223
        %v311 = vunpack.c.l.b16 %v224
        %v312 = vunpack.c.l.b16 %v225
        %v313 = vunpack.c.l.b16 %v226
        %v314 = vunpack.c.l.b16 %v227
        %v315 = vunpack.c.l.b16 %v228
        %v316 = vunpack.c.l.b16 %v229
        %v317 = vunpack.c.l.b16 %v230
        %v318 = vunpack.c.l.b16 %v231
        %v319 = vunpack.c.l.b16 %v232
        %v320 = vunpack.c.l.b16 %v233
        %v321 = vunpack.c.l.b16 %v234
        %v322 = vunpack.c.l.b16 %v235
        %v323 = vunpack.c.l.b16 %v236
        %v324 = vunpack.c.l.b16 %v237
        %v325 = vunpack.c.l.b16 %v238
        %v326 = vpack.c.b16 %v311, %v310
        %v327 = vpack.c.b16 %v313, %v312
        %v328 = vpack.c.b16 %v315, %v314
        %v329 = vpack.c.b16 %v317, %v316
        %v330 = vpack.c.b16 %v319, %v318
        %v331 = vpack.c.b16 %v321, %v320
        %v332 = vpack.c.b16 %v323, %v322
        %v333 = vpack.c.b16 %v325, %v324
        %342 = vmatprep.subr.bf16.mxu0 0
        %343 = vmatpush1.bf16.msra.mxu0 %v326
        %344 = vmatprep.subr.bf16.mxu0 0
        %345 = vmatpush1.bf16.msra.mxu0 %v327
        %346 = vmatprep.subr.bf16.mxu0 0
        %347 = vmatpush1.bf16.msra.mxu0 %v328
        %348 = vmatprep.subr.bf16.mxu0 0
        %349 = vmatpush1.bf16.msra.mxu0 %v329
        %350 = vmatprep.subr.bf16.mxu0 0
        %351 = vmatpush1.bf16.msra.mxu0 %v330
        %352 = vmatprep.subr.bf16.mxu0 0
        %353 = vmatpush1.bf16.msra.mxu0 %v331
        %354 = vmatprep.subr.bf16.mxu0 0
        %355 = vmatpush1.bf16.msra.mxu0 %v332
        %356 = vmatprep.subr.bf16.mxu0 0
        %357 = vmatpush1.bf16.msra.mxu0 %v333
        %358 = vmatprep.subr.bf16.mxu0 0
        %359 = vmatpush1.bf16.msra.mxu0 0
        %360 = vmatprep.subr.bf16.mxu0 0
        %361 = vmatpush1.bf16.msra.mxu0 0
        %362 = vmatprep.subr.bf16.mxu0 0
        %363 = vmatpush1.bf16.msra.mxu0 0
        %364 = vmatprep.subr.bf16.mxu0 0
        %365 = vmatpush1.bf16.msra.mxu0 0
        %366 = vmatprep.subr.bf16.mxu0 0
        %367 = vmatpush1.bf16.msra.mxu0 0
        %368 = vmatprep.subr.bf16.mxu0 0
        %369 = vmatpush1.bf16.msra.mxu0 0
        %370 = vmatprep.subr.bf16.mxu0 0
        %371 = vmatpush1.bf16.msra.mxu0 0
        %372 = vmatprep.subr.bf16.mxu0 0
        %373 = vmatpush1.bf16.msra.mxu0 0
        %374 = vmatprep.mubr.bf16.mxu0 0
        %375 = vmatmul.mubr.bf16.gmra.mrb[0].mxu0 %v278
        %v376 = vpop.f32.mrb[0].mxu0
        %v377 = vadd.f32 %v244, %v376
        %v378 = vpop.f32.mrb[0].mxu0
        %v379 = vpop.f32.mrb[0].mxu0
        %v380 = vadd.f32 %v244, %v379
        %v381 = vpop.f32.mrb[0].mxu0
        %382 = vmatprep.mubr.bf16.mxu0 0
        %383 = vmatmul.mubr.bf16.gmra.mrb[0].mxu0 %v279
        %v384 = vpop.f32.mrb[0].mxu0
        %v385 = vadd.f32 %v244, %v384
        %v386 = vpop.f32.mrb[0].mxu0
        %v387 = vpop.f32.mrb[0].mxu0
        %v388 = vadd.f32 %v244, %v387
        %v389 = vpop.f32.mrb[0].mxu0
        %390 = vmatprep.mubr.bf16.mxu0 0
        %391 = vmatmul.mubr.bf16.gmra.mrb[0].mxu0 %v280
        %v392 = vpop.f32.mrb[0].mxu0
        %v393 = vadd.f32 %v244, %v392
        %v394 = vpop.f32.mrb[0].mxu0
        %v395 = vpop.f32.mrb[0].mxu0
        %v396 = vadd.f32 %v244, %v395
        %v397 = vpop.f32.mrb[0].mxu0
        %398 = vmatprep.mubr.bf16.mxu0 0
        %399 = vmatmul.mubr.bf16.gmra.mrb[0].mxu0 %v281
        %v400 = vpop.f32.mrb[0].mxu0
        %v401 = vadd.f32 %v244, %v400
        %v402 = vpop.f32.mrb[0].mxu0
        %v403 = vpop.f32.mrb[0].mxu0
        %v404 = vadd.f32 %v244, %v403
        %v405 = vpop.f32.mrb[0].mxu0
        %406 = vmatprep.mubr.bf16.mxu0 0
        %407 = vmatmul.mubr.bf16.gmra.mrb[0].mxu0 %v282
        %v408 = vpop.f32.mrb[0].mxu0
        %v409 = vadd.f32 %v244, %v408
        %v410 = vpop.f32.mrb[0].mxu0
        %v411 = vpop.f32.mrb[0].mxu0
        %v412 = vadd.f32 %v244, %v411
        %v413 = vpop.f32.mrb[0].mxu0
        %414 = vmatprep.mubr.bf16.mxu0 0
        %415 = vmatmul.mubr.bf16.gmra.mrb[0].mxu0 %v283
        %v416 = vpop.f32.mrb[0].mxu0
        %v417 = vadd.f32 %v244, %v416
        %v418 = vpop.f32.mrb[0].mxu0
        %v419 = vpop.f32.mrb[0].mxu0
        %v420 = vadd.f32 %v244, %v419
        %v421 = vpop.f32.mrb[0].mxu0
        %422 = vmatprep.mubr.bf16.mxu0 0
        %423 = vmatmul.mubr.bf16.gmra.mrb[0].mxu0 %v284
        %v424 = vpop.f32.mrb[0].mxu0
        %v425 = vadd.f32 %v244, %v424
        %v426 = vpop.f32.mrb[0].mxu0
        %v427 = vpop.f32.mrb[0].mxu0
        %v428 = vadd.f32 %v244, %v427
        %v429 = vpop.f32.mrb[0].mxu0
        %430 = vmatprep.mubr.bf16.mxu0 0
        %431 = vmatmul.mubr.bf16.gmra.mrb[0].mxu0 %v285
        %v432 = vpop.f32.mrb[0].mxu0
        %v433 = vadd.f32 %v244, %v432
        %v434 = vpop.f32.mrb[0].mxu0
        %v435 = vpop.f32.mrb[0].mxu0
        %v436 = vadd.f32 %v244, %v435
        %v437 = vpop.f32.mrb[0].mxu0
        %438 = vdwg.mxu0
        %v439 = vlaneseq
        %v440 = vand.u32 %v439, 127
        %441 = vmax.xlane.f32.xlu0 %v377
        %v442 = vpop.xlane.xlu0 %441
        %443 = vmax.xlane.f32.xlu0 %v380
        %v444 = vpop.xlane.xlu0 %443
        %445 = vmax.xlane.f32.xlu0 %v385
        %v446 = vpop.xlane.xlu0 %445
        %447 = vmax.xlane.f32.xlu0 %v388
        %v448 = vpop.xlane.xlu0 %447
        %449 = vmax.xlane.f32.xlu0 %v393
        %v450 = vpop.xlane.xlu0 %449
        %451 = vmax.xlane.f32.xlu0 %v396
        %v452 = vpop.xlane.xlu0 %451
        %453 = vmax.xlane.f32.xlu0 %v401
        %v454 = vpop.xlane.xlu0 %453
        %455 = vmax.xlane.f32.xlu0 %v404
        %v456 = vpop.xlane.xlu0 %455
        %457 = vmax.xlane.f32.xlu0 %v409
        %v458 = vpop.xlane.xlu0 %457
        %459 = vmax.xlane.f32.xlu0 %v412
        %v460 = vpop.xlane.xlu0 %459
        %461 = vmax.xlane.f32.xlu0 %v417
        %v462 = vpop.xlane.xlu0 %461
        %463 = vmax.xlane.f32.xlu0 %v420
        %v464 = vpop.xlane.xlu0 %463
        %465 = vmax.xlane.f32.xlu0 %v425
        %v466 = vpop.xlane.xlu0 %465
        %467 = vmax.xlane.f32.xlu0 %v428
        %v468 = vpop.xlane.xlu0 %467
        %469 = vmax.xlane.f32.xlu0 %v433
        %v470 = vpop.xlane.xlu0 %469
        %471 = vmax.xlane.f32.xlu0 %v436
        %v472 = vpop.xlane.xlu0 %471
        %vm473 = vcmp.eq.f32.partialorder %v377, %v442
        %vm474 = vcmp.eq.f32.partialorder %v380, %v444
        %vm475 = vcmp.eq.f32.partialorder %v385, %v446
        %vm476 = vcmp.eq.f32.partialorder %v388, %v448
        %vm477 = vcmp.eq.f32.partialorder %v393, %v450
        %vm478 = vcmp.eq.f32.partialorder %v396, %v452
        %vm479 = vcmp.eq.f32.partialorder %v401, %v454
        %vm480 = vcmp.eq.f32.partialorder %v404, %v456
        %vm481 = vcmp.eq.f32.partialorder %v409, %v458
        %vm482 = vcmp.eq.f32.partialorder %v412, %v460
        %vm483 = vcmp.eq.f32.partialorder %v417, %v462
        %vm484 = vcmp.eq.f32.partialorder %v420, %v464
        %vm485 = vcmp.eq.f32.partialorder %v425, %v466
        %vm486 = vcmp.eq.f32.partialorder %v428, %v468
        %vm487 = vcmp.eq.f32.partialorder %v433, %v470
        %vm488 = vcmp.eq.f32.partialorder %v436, %v472
        %v489 = vsel %vm473, %v440, 128
        %v490 = vsel %vm474, %v440, 128
        %v491 = vsel %vm475, %v440, 128
        %v492 = vsel %vm476, %v440, 128
        %v493 = vsel %vm477, %v440, 128
        %v494 = vsel %vm478, %v440, 128
        %v495 = vsel %vm479, %v440, 128
        %v496 = vsel %vm480, %v440, 128
        %v497 = vsel %vm481, %v440, 128
        %v498 = vsel %vm482, %v440, 128
        %v499 = vsel %vm483, %v440, 128
        %v500 = vsel %vm484, %v440, 128
        %v501 = vsel %vm485, %v440, 128
        %v502 = vsel %vm486, %v440, 128
        %v503 = vsel %vm487, %v440, 128
        %v504 = vsel %vm488, %v440, 128
        %v505 = vand.u32 %v489, 65535
        %v506 = vshra.s32 %v489, 16
        %v507 = vcvt.s32.f32 %v505
        %v508 = vcvt.s32.f32 %v506
        %509 = vmin.xlane.f32.xlu0 %v508
        %v510 = vpop.xlane.xlu0 %509
        %vm511 = vcmp.eq.f32.partialorder %v508, %v510
        %v512 = vsel %vm511, %v507, inf
        %513 = vmin.xlane.f32.xlu0 %v512
        %v514 = vpop.xlane.xlu0 %513
        %v515 = vcvt.f32.s32 %v514
        %v516 = vcvt.f32.s32 %v510
        %v517 = vshll.u32 %v516, 16
        %v518 = vadd.s32 %v517, %v515
        %v519 = vand.u32 %v490, 65535
        %v520 = vshra.s32 %v490, 16
        %v521 = vcvt.s32.f32 %v519
        %v522 = vcvt.s32.f32 %v520
        %523 = vmin.xlane.f32.xlu0 %v522
        %v524 = vpop.xlane.xlu0 %523
        %vm525 = vcmp.eq.f32.partialorder %v522, %v524
        %v526 = vsel %vm525, %v521, inf
        %527 = vmin.xlane.f32.xlu0 %v526
        %v528 = vpop.xlane.xlu0 %527
        %v529 = vcvt.f32.s32 %v528
        %v530 = vcvt.f32.s32 %v524
        %v531 = vshll.u32 %v530, 16
        %v532 = vadd.s32 %v531, %v529
        %v533 = vand.u32 %v491, 65535
        %v534 = vshra.s32 %v491, 16
        %v535 = vcvt.s32.f32 %v533
        %v536 = vcvt.s32.f32 %v534
        %537 = vmin.xlane.f32.xlu0 %v536
        %v538 = vpop.xlane.xlu0 %537
        %vm539 = vcmp.eq.f32.partialorder %v536, %v538
        %v540 = vsel %vm539, %v535, inf
        %541 = vmin.xlane.f32.xlu0 %v540
        %v542 = vpop.xlane.xlu0 %541
        %v543 = vcvt.f32.s32 %v542
        %v544 = vcvt.f32.s32 %v538
        %v545 = vshll.u32 %v544, 16
        %v546 = vadd.s32 %v545, %v543
        %v547 = vand.u32 %v492, 65535
        %v548 = vshra.s32 %v492, 16
        %v549 = vcvt.s32.f32 %v547
        %v550 = vcvt.s32.f32 %v548
        %551 = vmin.xlane.f32.xlu0 %v550
        %v552 = vpop.xlane.xlu0 %551
        %vm553 = vcmp.eq.f32.partialorder %v550, %v552
        %v554 = vsel %vm553, %v549, inf
        %555 = vmin.xlane.f32.xlu0 %v554
        %v556 = vpop.xlane.xlu0 %555
        %v557 = vcvt.f32.s32 %v556
        %v558 = vcvt.f32.s32 %v552
        %v559 = vshll.u32 %v558, 16
        %v560 = vadd.s32 %v559, %v557
        %v561 = vand.u32 %v493, 65535
        %v562 = vshra.s32 %v493, 16
        %v563 = vcvt.s32.f32 %v561
        %v564 = vcvt.s32.f32 %v562
        %565 = vmin.xlane.f32.xlu0 %v564
        %v566 = vpop.xlane.xlu0 %565
        %vm567 = vcmp.eq.f32.partialorder %v564, %v566
        %v568 = vsel %vm567, %v563, inf
        %569 = vmin.xlane.f32.xlu0 %v568
        %v570 = vpop.xlane.xlu0 %569
        %v571 = vcvt.f32.s32 %v570
        %v572 = vcvt.f32.s32 %v566
        %v573 = vshll.u32 %v572, 16
        %v574 = vadd.s32 %v573, %v571
        %v575 = vand.u32 %v494, 65535
        %v576 = vshra.s32 %v494, 16
        %v577 = vcvt.s32.f32 %v575
        %v578 = vcvt.s32.f32 %v576
        %579 = vmin.xlane.f32.xlu0 %v578
        %v580 = vpop.xlane.xlu0 %579
        %vm581 = vcmp.eq.f32.partialorder %v578, %v580
        %v582 = vsel %vm581, %v577, inf
        %583 = vmin.xlane.f32.xlu0 %v582
        %v584 = vpop.xlane.xlu0 %583
        %v585 = vcvt.f32.s32 %v584
        %v586 = vcvt.f32.s32 %v580
        %v587 = vshll.u32 %v586, 16
        %v588 = vadd.s32 %v587, %v585
        %v589 = vand.u32 %v495, 65535
        %v590 = vshra.s32 %v495, 16
        %v591 = vcvt.s32.f32 %v589
        %v592 = vcvt.s32.f32 %v590
        %593 = vmin.xlane.f32.xlu0 %v592
        %v594 = vpop.xlane.xlu0 %593
        %vm595 = vcmp.eq.f32.partialorder %v592, %v594
        %v596 = vsel %vm595, %v591, inf
        %597 = vmin.xlane.f32.xlu0 %v596
        %v598 = vpop.xlane.xlu0 %597
        %v599 = vcvt.f32.s32 %v598
        %v600 = vcvt.f32.s32 %v594
        %v601 = vshll.u32 %v600, 16
        %v602 = vadd.s32 %v601, %v599
        %v603 = vand.u32 %v496, 65535
        %v604 = vshra.s32 %v496, 16
        %v605 = vcvt.s32.f32 %v603
        %v606 = vcvt.s32.f32 %v604
        %607 = vmin.xlane.f32.xlu0 %v606
        %v608 = vpop.xlane.xlu0 %607
        %vm609 = vcmp.eq.f32.partialorder %v606, %v608
        %v610 = vsel %vm609, %v605, inf
        %611 = vmin.xlane.f32.xlu0 %v610
        %v612 = vpop.xlane.xlu0 %611
        %v613 = vcvt.f32.s32 %v612
        %v614 = vcvt.f32.s32 %v608
        %v615 = vshll.u32 %v614, 16
        %v616 = vadd.s32 %v615, %v613
        %v617 = vand.u32 %v497, 65535
        %v618 = vshra.s32 %v497, 16
        %v619 = vcvt.s32.f32 %v617
        %v620 = vcvt.s32.f32 %v618
        %621 = vmin.xlane.f32.xlu0 %v620
        %v622 = vpop.xlane.xlu0 %621
        %vm623 = vcmp.eq.f32.partialorder %v620, %v622
        %v624 = vsel %vm623, %v619, inf
        %625 = vmin.xlane.f32.xlu0 %v624
        %v626 = vpop.xlane.xlu0 %625
        %v627 = vcvt.f32.s32 %v626
        %v628 = vcvt.f32.s32 %v622
        %v629 = vshll.u32 %v628, 16
        %v630 = vadd.s32 %v629, %v627
        %v631 = vand.u32 %v498, 65535
        %v632 = vshra.s32 %v498, 16
        %v633 = vcvt.s32.f32 %v631
        %v634 = vcvt.s32.f32 %v632
        %635 = vmin.xlane.f32.xlu0 %v634
        %v636 = vpop.xlane.xlu0 %635
        %vm637 = vcmp.eq.f32.partialorder %v634, %v636
        %v638 = vsel %vm637, %v633, inf
        %639 = vmin.xlane.f32.xlu0 %v638
        %v640 = vpop.xlane.xlu0 %639
        %v641 = vcvt.f32.s32 %v640
        %v642 = vcvt.f32.s32 %v636
        %v643 = vshll.u32 %v642, 16
        %v644 = vadd.s32 %v643, %v641
        %v645 = vand.u32 %v499, 65535
        %v646 = vshra.s32 %v499, 16
        %v647 = vcvt.s32.f32 %v645
        %v648 = vcvt.s32.f32 %v646
        %649 = vmin.xlane.f32.xlu0 %v648
        %v650 = vpop.xlane.xlu0 %649
        %vm651 = vcmp.eq.f32.partialorder %v648, %v650
        %v652 = vsel %vm651, %v647, inf
        %653 = vmin.xlane.f32.xlu0 %v652
        %v654 = vpop.xlane.xlu0 %653
        %v655 = vcvt.f32.s32 %v654
        %v656 = vcvt.f32.s32 %v650
        %v657 = vshll.u32 %v656, 16
        %v658 = vadd.s32 %v657, %v655
        %v659 = vand.u32 %v500, 65535
        %v660 = vshra.s32 %v500, 16
        %v661 = vcvt.s32.f32 %v659
        %v662 = vcvt.s32.f32 %v660
        %663 = vmin.xlane.f32.xlu0 %v662
        %v664 = vpop.xlane.xlu0 %663
        %vm665 = vcmp.eq.f32.partialorder %v662, %v664
        %v666 = vsel %vm665, %v661, inf
        %667 = vmin.xlane.f32.xlu0 %v666
        %v668 = vpop.xlane.xlu0 %667
        %v669 = vcvt.f32.s32 %v668
        %v670 = vcvt.f32.s32 %v664
        %v671 = vshll.u32 %v670, 16
        %v672 = vadd.s32 %v671, %v669
        %v673 = vand.u32 %v501, 65535
        %v674 = vshra.s32 %v501, 16
        %v675 = vcvt.s32.f32 %v673
        %v676 = vcvt.s32.f32 %v674
        %677 = vmin.xlane.f32.xlu0 %v676
        %v678 = vpop.xlane.xlu0 %677
        %vm679 = vcmp.eq.f32.partialorder %v676, %v678
        %v680 = vsel %vm679, %v675, inf
        %681 = vmin.xlane.f32.xlu0 %v680
        %v682 = vpop.xlane.xlu0 %681
        %v683 = vcvt.f32.s32 %v682
        %v684 = vcvt.f32.s32 %v678
        %v685 = vshll.u32 %v684, 16
        %v686 = vadd.s32 %v685, %v683
        %v687 = vand.u32 %v502, 65535
        %v688 = vshra.s32 %v502, 16
        %v689 = vcvt.s32.f32 %v687
        %v690 = vcvt.s32.f32 %v688
        %691 = vmin.xlane.f32.xlu0 %v690
        %v692 = vpop.xlane.xlu0 %691
        %vm693 = vcmp.eq.f32.partialorder %v690, %v692
        %v694 = vsel %vm693, %v689, inf
        %695 = vmin.xlane.f32.xlu0 %v694
        %v696 = vpop.xlane.xlu0 %695
        %v697 = vcvt.f32.s32 %v696
        %v698 = vcvt.f32.s32 %v692
        %v699 = vshll.u32 %v698, 16
        %v700 = vadd.s32 %v699, %v697
        %v701 = vand.u32 %v503, 65535
        %v702 = vshra.s32 %v503, 16
        %v703 = vcvt.s32.f32 %v701
        %v704 = vcvt.s32.f32 %v702
        %705 = vmin.xlane.f32.xlu0 %v704
        %v706 = vpop.xlane.xlu0 %705
        %vm707 = vcmp.eq.f32.partialorder %v704, %v706
        %v708 = vsel %vm707, %v703, inf
        %709 = vmin.xlane.f32.xlu0 %v708
        %v710 = vpop.xlane.xlu0 %709
        %v711 = vcvt.f32.s32 %v710
        %v712 = vcvt.f32.s32 %v706
        %v713 = vshll.u32 %v712, 16
        %v714 = vadd.s32 %v713, %v711
        %v715 = vand.u32 %v504, 65535
        %v716 = vshra.s32 %v504, 16
        %v717 = vcvt.s32.f32 %v715
        %v718 = vcvt.s32.f32 %v716
        %719 = vmin.xlane.f32.xlu0 %v718
        %v720 = vpop.xlane.xlu0 %719
        %vm721 = vcmp.eq.f32.partialorder %v718, %v720
        %v722 = vsel %vm721, %v717, inf
        %723 = vmin.xlane.f32.xlu0 %v722
        %v724 = vpop.xlane.xlu0 %723
        %v725 = vcvt.f32.s32 %v724
        %v726 = vcvt.f32.s32 %v720
        %v727 = vshll.u32 %v726, 16
        %v728 = vadd.s32 %v727, %v725
        %vm729 = vcmp.eq.s32.totalorder %v440, %v518
        %vm730 = vcmp.eq.s32.totalorder %v440, %v532
        %vm731 = vcmp.eq.s32.totalorder %v440, %v546
        %vm732 = vcmp.eq.s32.totalorder %v440, %v560
        %vm733 = vcmp.eq.s32.totalorder %v440, %v574
        %vm734 = vcmp.eq.s32.totalorder %v440, %v588
        %vm735 = vcmp.eq.s32.totalorder %v440, %v602
        %vm736 = vcmp.eq.s32.totalorder %v440, %v616
        %vm737 = vcmp.eq.s32.totalorder %v440, %v630
        %vm738 = vcmp.eq.s32.totalorder %v440, %v644
        %vm739 = vcmp.eq.s32.totalorder %v440, %v658
        %vm740 = vcmp.eq.s32.totalorder %v440, %v672
        %vm741 = vcmp.eq.s32.totalorder %v440, %v686
        %vm742 = vcmp.eq.s32.totalorder %v440, %v700
        %vm743 = vcmp.eq.s32.totalorder %v440, %v714
        %vm744 = vcmp.eq.s32.totalorder %v440, %v728
        %v745 = vsel %vm729, -inf, %v377
        %v746 = vsel %vm730, -inf, %v380
        %v747 = vsel %vm731, -inf, %v385
        %v748 = vsel %vm732, -inf, %v388
        %v749 = vsel %vm733, -inf, %v393
        %v750 = vsel %vm734, -inf, %v396
        %v751 = vsel %vm735, -inf, %v401
        %v752 = vsel %vm736, -inf, %v404
        %v753 = vsel %vm737, -inf, %v409
        %v754 = vsel %vm738, -inf, %v412
        %v755 = vsel %vm739, -inf, %v417
        %v756 = vsel %vm740, -inf, %v420
        %v757 = vsel %vm741, -inf, %v425
        %v758 = vsel %vm742, -inf, %v428
        %v759 = vsel %vm743, -inf, %v433
        %v760 = vsel %vm744, -inf, %v436
        %761 = vmax.xlane.f32.xlu0 %v745
        %v762 = vpop.xlane.xlu0 %761
        %763 = vmax.xlane.f32.xlu0 %v746
        %v764 = vpop.xlane.xlu0 %763
        %765 = vmax.xlane.f32.xlu0 %v747
        %v766 = vpop.xlane.xlu0 %765
        %767 = vmax.xlane.f32.xlu0 %v748
        %v768 = vpop.xlane.xlu0 %767
        %769 = vmax.xlane.f32.xlu0 %v749
        %v770 = vpop.xlane.xlu0 %769
        %771 = vmax.xlane.f32.xlu0 %v750
        %v772 = vpop.xlane.xlu0 %771
        %773 = vmax.xlane.f32.xlu0 %v751
        %v774 = vpop.xlane.xlu0 %773
        %775 = vmax.xlane.f32.xlu0 %v752
        %v776 = vpop.xlane.xlu0 %775
        %777 = vmax.xlane.f32.xlu0 %v753
        %v778 = vpop.xlane.xlu0 %777
        %779 = vmax.xlane.f32.xlu0 %v754
        %v780 = vpop.xlane.xlu0 %779
        %781 = vmax.xlane.f32.xlu0 %v755
        %v782 = vpop.xlane.xlu0 %781
        %783 = vmax.xlane.f32.xlu0 %v756
        %v784 = vpop.xlane.xlu0 %783
        %785 = vmax.xlane.f32.xlu0 %v757
        %v786 = vpop.xlane.xlu0 %785
        %787 = vmax.xlane.f32.xlu0 %v758
        %v788 = vpop.xlane.xlu0 %787
        %789 = vmax.xlane.f32.xlu0 %v759
        %v790 = vpop.xlane.xlu0 %789
        %791 = vmax.xlane.f32.xlu0 %v760
        %v792 = vpop.xlane.xlu0 %791
        %vm793 = vcmp.eq.f32.partialorder %v745, %v762
        %vm794 = vcmp.eq.f32.partialorder %v746, %v764
        %vm795 = vcmp.eq.f32.partialorder %v747, %v766
        %vm796 = vcmp.eq.f32.partialorder %v748, %v768
        %vm797 = vcmp.eq.f32.partialorder %v749, %v770
        %vm798 = vcmp.eq.f32.partialorder %v750, %v772
        %vm799 = vcmp.eq.f32.partialorder %v751, %v774
        %vm800 = vcmp.eq.f32.partialorder %v752, %v776
        %vm801 = vcmp.eq.f32.partialorder %v753, %v778
        %vm802 = vcmp.eq.f32.partialorder %v754, %v780
        %vm803 = vcmp.eq.f32.partialorder %v755, %v782
        %vm804 = vcmp.eq.f32.partialorder %v756, %v784
        %vm805 = vcmp.eq.f32.partialorder %v757, %v786
        %vm806 = vcmp.eq.f32.partialorder %v758, %v788
        %vm807 = vcmp.eq.f32.partialorder %v759, %v790
        %vm808 = vcmp.eq.f32.partialorder %v760, %v792
        %v809 = vsel %vm793, %v440, 128
        %v810 = vsel %vm794, %v440, 128
        %v811 = vsel %vm795, %v440, 128
        %v812 = vsel %vm796, %v440, 128
        %v813 = vsel %vm797, %v440, 128
        %v814 = vsel %vm798, %v440, 128
        %v815 = vsel %vm799, %v440, 128
        %v816 = vsel %vm800, %v440, 128
        %v817 = vsel %vm801, %v440, 128
        %v818 = vsel %vm802, %v440, 128
        %v819 = vsel %vm803, %v440, 128
        %v820 = vsel %vm804, %v440, 128
        %v821 = vsel %vm805, %v440, 128
        %v822 = vsel %vm806, %v440, 128
        %v823 = vsel %vm807, %v440, 128
        %v824 = vsel %vm808, %v440, 128
        %v825 = vand.u32 %v809, 65535
        %v826 = vshra.s32 %v809, 16
        %v827 = vcvt.s32.f32 %v825
        %v828 = vcvt.s32.f32 %v826
        %829 = vmin.xlane.f32.xlu0 %v828
        %v830 = vpop.xlane.xlu0 %829
        %vm831 = vcmp.eq.f32.partialorder %v828, %v830
        %v832 = vsel %vm831, %v827, inf
        %833 = vmin.xlane.f32.xlu0 %v832
        %v834 = vpop.xlane.xlu0 %833
        %v835 = vcvt.f32.s32 %v834
        %v836 = vcvt.f32.s32 %v830
        %v837 = vshll.u32 %v836, 16
        %v838 = vadd.s32 %v837, %v835
        %v839 = vand.u32 %v810, 65535
        %v840 = vshra.s32 %v810, 16
        %v841 = vcvt.s32.f32 %v839
        %v842 = vcvt.s32.f32 %v840
        %843 = vmin.xlane.f32.xlu0 %v842
        %v844 = vpop.xlane.xlu0 %843
        %vm845 = vcmp.eq.f32.partialorder %v842, %v844
        %v846 = vsel %vm845, %v841, inf
        %847 = vmin.xlane.f32.xlu0 %v846
        %v848 = vpop.xlane.xlu0 %847
        %v849 = vcvt.f32.s32 %v848
        %v850 = vcvt.f32.s32 %v844
        %v851 = vshll.u32 %v850, 16
        %v852 = vadd.s32 %v851, %v849
        %v853 = vand.u32 %v811, 65535
        %v854 = vshra.s32 %v811, 16
        %v855 = vcvt.s32.f32 %v853
        %v856 = vcvt.s32.f32 %v854
        %857 = vmin.xlane.f32.xlu0 %v856
        %v858 = vpop.xlane.xlu0 %857
        %vm859 = vcmp.eq.f32.partialorder %v856, %v858
        %v860 = vsel %vm859, %v855, inf
        %861 = vmin.xlane.f32.xlu0 %v860
        %v862 = vpop.xlane.xlu0 %861
        %v863 = vcvt.f32.s32 %v862
        %v864 = vcvt.f32.s32 %v858
        %v865 = vshll.u32 %v864, 16
        %v866 = vadd.s32 %v865, %v863
        %v867 = vand.u32 %v812, 65535
        %v868 = vshra.s32 %v812, 16
        %v869 = vcvt.s32.f32 %v867
        %v870 = vcvt.s32.f32 %v868
        %871 = vmin.xlane.f32.xlu0 %v870
        %v872 = vpop.xlane.xlu0 %871
        %vm873 = vcmp.eq.f32.partialorder %v870, %v872
        %v874 = vsel %vm873, %v869, inf
        %875 = vmin.xlane.f32.xlu0 %v874
        %v876 = vpop.xlane.xlu0 %875
        %v877 = vcvt.f32.s32 %v876
        %v878 = vcvt.f32.s32 %v872
        %v879 = vshll.u32 %v878, 16
        %v880 = vadd.s32 %v879, %v877
        %v881 = vand.u32 %v813, 65535
        %v882 = vshra.s32 %v813, 16
        %v883 = vcvt.s32.f32 %v881
        %v884 = vcvt.s32.f32 %v882
        %885 = vmin.xlane.f32.xlu0 %v884
        %v886 = vpop.xlane.xlu0 %885
        %vm887 = vcmp.eq.f32.partialorder %v884, %v886
        %v888 = vsel %vm887, %v883, inf
        %889 = vmin.xlane.f32.xlu0 %v888
        %v890 = vpop.xlane.xlu0 %889
        %v891 = vcvt.f32.s32 %v890
        %v892 = vcvt.f32.s32 %v886
        %v893 = vshll.u32 %v892, 16
        %v894 = vadd.s32 %v893, %v891
        %v895 = vand.u32 %v814, 65535
        %v896 = vshra.s32 %v814, 16
        %v897 = vcvt.s32.f32 %v895
        %v898 = vcvt.s32.f32 %v896
        %899 = vmin.xlane.f32.xlu0 %v898
        %v900 = vpop.xlane.xlu0 %899
        %vm901 = vcmp.eq.f32.partialorder %v898, %v900
        %v902 = vsel %vm901, %v897, inf
        %903 = vmin.xlane.f32.xlu0 %v902
        %v904 = vpop.xlane.xlu0 %903
        %v905 = vcvt.f32.s32 %v904
        %v906 = vcvt.f32.s32 %v900
        %v907 = vshll.u32 %v906, 16
        %v908 = vadd.s32 %v907, %v905
        %v909 = vand.u32 %v815, 65535
        %v910 = vshra.s32 %v815, 16
        %v911 = vcvt.s32.f32 %v909
        %v912 = vcvt.s32.f32 %v910
        %913 = vmin.xlane.f32.xlu0 %v912
        %v914 = vpop.xlane.xlu0 %913
        %vm915 = vcmp.eq.f32.partialorder %v912, %v914
        %v916 = vsel %vm915, %v911, inf
        %917 = vmin.xlane.f32.xlu0 %v916
        %v918 = vpop.xlane.xlu0 %917
        %v919 = vcvt.f32.s32 %v918
        %v920 = vcvt.f32.s32 %v914
        %v921 = vshll.u32 %v920, 16
        %v922 = vadd.s32 %v921, %v919
        %v923 = vand.u32 %v816, 65535
        %v924 = vshra.s32 %v816, 16
        %v925 = vcvt.s32.f32 %v923
        %v926 = vcvt.s32.f32 %v924
        %927 = vmin.xlane.f32.xlu0 %v926
        %v928 = vpop.xlane.xlu0 %927
        %vm929 = vcmp.eq.f32.partialorder %v926, %v928
        %v930 = vsel %vm929, %v925, inf
        %931 = vmin.xlane.f32.xlu0 %v930
        %v932 = vpop.xlane.xlu0 %931
        %v933 = vcvt.f32.s32 %v932
        %v934 = vcvt.f32.s32 %v928
        %v935 = vshll.u32 %v934, 16
        %v936 = vadd.s32 %v935, %v933
        %v937 = vand.u32 %v817, 65535
        %v938 = vshra.s32 %v817, 16
        %v939 = vcvt.s32.f32 %v937
        %v940 = vcvt.s32.f32 %v938
        %941 = vmin.xlane.f32.xlu0 %v940
        %v942 = vpop.xlane.xlu0 %941
        %vm943 = vcmp.eq.f32.partialorder %v940, %v942
        %v944 = vsel %vm943, %v939, inf
        %945 = vmin.xlane.f32.xlu0 %v944
        %v946 = vpop.xlane.xlu0 %945
        %v947 = vcvt.f32.s32 %v946
        %v948 = vcvt.f32.s32 %v942
        %v949 = vshll.u32 %v948, 16
        %v950 = vadd.s32 %v949, %v947
        %v951 = vand.u32 %v818, 65535
        %v952 = vshra.s32 %v818, 16
        %v953 = vcvt.s32.f32 %v951
        %v954 = vcvt.s32.f32 %v952
        %955 = vmin.xlane.f32.xlu0 %v954
        %v956 = vpop.xlane.xlu0 %955
        %vm957 = vcmp.eq.f32.partialorder %v954, %v956
        %v958 = vsel %vm957, %v953, inf
        %959 = vmin.xlane.f32.xlu0 %v958
        %v960 = vpop.xlane.xlu0 %959
        %v961 = vcvt.f32.s32 %v960
        %v962 = vcvt.f32.s32 %v956
        %v963 = vshll.u32 %v962, 16
        %v964 = vadd.s32 %v963, %v961
        %v965 = vand.u32 %v819, 65535
        %v966 = vshra.s32 %v819, 16
        %v967 = vcvt.s32.f32 %v965
        %v968 = vcvt.s32.f32 %v966
        %969 = vmin.xlane.f32.xlu0 %v968
        %v970 = vpop.xlane.xlu0 %969
        %vm971 = vcmp.eq.f32.partialorder %v968, %v970
        %v972 = vsel %vm971, %v967, inf
        %973 = vmin.xlane.f32.xlu0 %v972
        %v974 = vpop.xlane.xlu0 %973
        %v975 = vcvt.f32.s32 %v974
        %v976 = vcvt.f32.s32 %v970
        %v977 = vshll.u32 %v976, 16
        %v978 = vadd.s32 %v977, %v975
        %v979 = vand.u32 %v820, 65535
        %v980 = vshra.s32 %v820, 16
        %v981 = vcvt.s32.f32 %v979
        %v982 = vcvt.s32.f32 %v980
        %983 = vmin.xlane.f32.xlu0 %v982
        %v984 = vpop.xlane.xlu0 %983
        %vm985 = vcmp.eq.f32.partialorder %v982, %v984
        %v986 = vsel %vm985, %v981, inf
        %987 = vmin.xlane.f32.xlu0 %v986
        %v988 = vpop.xlane.xlu0 %987
        %v989 = vcvt.f32.s32 %v988
        %v990 = vcvt.f32.s32 %v984
        %v991 = vshll.u32 %v990, 16
        %v992 = vadd.s32 %v991, %v989
        %v993 = vand.u32 %v821, 65535
        %v994 = vshra.s32 %v821, 16
        %v995 = vcvt.s32.f32 %v993
        %v996 = vcvt.s32.f32 %v994
        %997 = vmin.xlane.f32.xlu0 %v996
        %v998 = vpop.xlane.xlu0 %997
        %vm999 = vcmp.eq.f32.partialorder %v996, %v998
        %v1000 = vsel %vm999, %v995, inf
        %1001 = vmin.xlane.f32.xlu0 %v1000
        %v1002 = vpop.xlane.xlu0 %1001
        %v1003 = vcvt.f32.s32 %v1002
        %v1004 = vcvt.f32.s32 %v998
        %v1005 = vshll.u32 %v1004, 16
        %v1006 = vadd.s32 %v1005, %v1003
        %v1007 = vand.u32 %v822, 65535
        %v1008 = vshra.s32 %v822, 16
        %v1009 = vcvt.s32.f32 %v1007
        %v1010 = vcvt.s32.f32 %v1008
        %1011 = vmin.xlane.f32.xlu0 %v1010
        %v1012 = vpop.xlane.xlu0 %1011
        %vm1013 = vcmp.eq.f32.partialorder %v1010, %v1012
        %v1014 = vsel %vm1013, %v1009, inf
        %1015 = vmin.xlane.f32.xlu0 %v1014
        %v1016 = vpop.xlane.xlu0 %1015
        %v1017 = vcvt.f32.s32 %v1016
        %v1018 = vcvt.f32.s32 %v1012
        %v1019 = vshll.u32 %v1018, 16
        %v1020 = vadd.s32 %v1019, %v1017
        %v1021 = vand.u32 %v823, 65535
        %v1022 = vshra.s32 %v823, 16
        %v1023 = vcvt.s32.f32 %v1021
        %v1024 = vcvt.s32.f32 %v1022
        %1025 = vmin.xlane.f32.xlu0 %v1024
        %v1026 = vpop.xlane.xlu0 %1025
        %vm1027 = vcmp.eq.f32.partialorder %v1024, %v1026
        %v1028 = vsel %vm1027, %v1023, inf
        %1029 = vmin.xlane.f32.xlu0 %v1028
        %v1030 = vpop.xlane.xlu0 %1029
        %v1031 = vcvt.f32.s32 %v1030
        %v1032 = vcvt.f32.s32 %v1026
        %v1033 = vshll.u32 %v1032, 16
        %v1034 = vadd.s32 %v1033, %v1031
        %v1035 = vand.u32 %v824, 65535
        %v1036 = vshra.s32 %v824, 16
        %v1037 = vcvt.s32.f32 %v1035
        %v1038 = vcvt.s32.f32 %v1036
        %1039 = vmin.xlane.f32.xlu0 %v1038
        %v1040 = vpop.xlane.xlu0 %1039
        %vm1041 = vcmp.eq.f32.partialorder %v1038, %v1040
        %v1042 = vsel %vm1041, %v1037, inf
        %1043 = vmin.xlane.f32.xlu0 %v1042
        %v1044 = vpop.xlane.xlu0 %1043
        %v1045 = vcvt.f32.s32 %v1044
        %v1046 = vcvt.f32.s32 %v1040
        %v1047 = vshll.u32 %v1046, 16
        %v1048 = vadd.s32 %v1047, %v1045
        %vm1049 = vcmp.eq.s32.totalorder %v440, %v838
        %vm1050 = vcmp.eq.s32.totalorder %v440, %v852
        %vm1051 = vcmp.eq.s32.totalorder %v440, %v866
        %vm1052 = vcmp.eq.s32.totalorder %v440, %v880
        %vm1053 = vcmp.eq.s32.totalorder %v440, %v894
        %vm1054 = vcmp.eq.s32.totalorder %v440, %v908
        %vm1055 = vcmp.eq.s32.totalorder %v440, %v922
        %vm1056 = vcmp.eq.s32.totalorder %v440, %v936
        %vm1057 = vcmp.eq.s32.totalorder %v440, %v950
        %vm1058 = vcmp.eq.s32.totalorder %v440, %v964
        %vm1059 = vcmp.eq.s32.totalorder %v440, %v978
        %vm1060 = vcmp.eq.s32.totalorder %v440, %v992
        %vm1061 = vcmp.eq.s32.totalorder %v440, %v1006
        %vm1062 = vcmp.eq.s32.totalorder %v440, %v1020
        %vm1063 = vcmp.eq.s32.totalorder %v440, %v1034
        %vm1064 = vcmp.eq.s32.totalorder %v440, %v1048
        %v1065 = vsel %vm1049, -inf, %v745
        %v1066 = vsel %vm1050, -inf, %v746
        %v1067 = vsel %vm1051, -inf, %v747
        %v1068 = vsel %vm1052, -inf, %v748
        %v1069 = vsel %vm1053, -inf, %v749
        %v1070 = vsel %vm1054, -inf, %v750
        %v1071 = vsel %vm1055, -inf, %v751
        %v1072 = vsel %vm1056, -inf, %v752
        %v1073 = vsel %vm1057, -inf, %v753
        %v1074 = vsel %vm1058, -inf, %v754
        %v1075 = vsel %vm1059, -inf, %v755
        %v1076 = vsel %vm1060, -inf, %v756
        %v1077 = vsel %vm1061, -inf, %v757
        %v1078 = vsel %vm1062, -inf, %v758
        %v1079 = vsel %vm1063, -inf, %v759
        %v1080 = vsel %vm1064, -inf, %v760
        %1081 = vmax.xlane.f32.xlu0 %v1065
        %v1082 = vpop.xlane.xlu0 %1081
        %1083 = vmax.xlane.f32.xlu0 %v1066
        %v1084 = vpop.xlane.xlu0 %1083
        %1085 = vmax.xlane.f32.xlu0 %v1067
        %v1086 = vpop.xlane.xlu0 %1085
        %1087 = vmax.xlane.f32.xlu0 %v1068
        %v1088 = vpop.xlane.xlu0 %1087
        %1089 = vmax.xlane.f32.xlu0 %v1069
        %v1090 = vpop.xlane.xlu0 %1089
        %1091 = vmax.xlane.f32.xlu0 %v1070
        %v1092 = vpop.xlane.xlu0 %1091
        %1093 = vmax.xlane.f32.xlu0 %v1071
        %v1094 = vpop.xlane.xlu0 %1093
        %1095 = vmax.xlane.f32.xlu0 %v1072
        %v1096 = vpop.xlane.xlu0 %1095
        %1097 = vmax.xlane.f32.xlu0 %v1073
        %v1098 = vpop.xlane.xlu0 %1097
        %1099 = vmax.xlane.f32.xlu0 %v1074
        %v1100 = vpop.xlane.xlu0 %1099
        %1101 = vmax.xlane.f32.xlu0 %v1075
        %v1102 = vpop.xlane.xlu0 %1101
        %1103 = vmax.xlane.f32.xlu0 %v1076
        %v1104 = vpop.xlane.xlu0 %1103
        %1105 = vmax.xlane.f32.xlu0 %v1077
        %v1106 = vpop.xlane.xlu0 %1105
        %1107 = vmax.xlane.f32.xlu0 %v1078
        %v1108 = vpop.xlane.xlu0 %1107
        %1109 = vmax.xlane.f32.xlu0 %v1079
        %v1110 = vpop.xlane.xlu0 %1109
        %1111 = vmax.xlane.f32.xlu0 %v1080
        %v1112 = vpop.xlane.xlu0 %1111
        %vm1113 = vcmp.eq.f32.partialorder %v1065, %v1082
        %vm1114 = vcmp.eq.f32.partialorder %v1066, %v1084
        %vm1115 = vcmp.eq.f32.partialorder %v1067, %v1086
        %vm1116 = vcmp.eq.f32.partialorder %v1068, %v1088
        %vm1117 = vcmp.eq.f32.partialorder %v1069, %v1090
        %vm1118 = vcmp.eq.f32.partialorder %v1070, %v1092
        %vm1119 = vcmp.eq.f32.partialorder %v1071, %v1094
        %vm1120 = vcmp.eq.f32.partialorder %v1072, %v1096
        %vm1121 = vcmp.eq.f32.partialorder %v1073, %v1098
        %vm1122 = vcmp.eq.f32.partialorder %v1074, %v1100
        %vm1123 = vcmp.eq.f32.partialorder %v1075, %v1102
        %vm1124 = vcmp.eq.f32.partialorder %v1076, %v1104
        %vm1125 = vcmp.eq.f32.partialorder %v1077, %v1106
        %vm1126 = vcmp.eq.f32.partialorder %v1078, %v1108
        %vm1127 = vcmp.eq.f32.partialorder %v1079, %v1110
        %vm1128 = vcmp.eq.f32.partialorder %v1080, %v1112
        %v1129 = vsel %vm1113, %v440, 128
        %v1130 = vsel %vm1114, %v440, 128
        %v1131 = vsel %vm1115, %v440, 128
        %v1132 = vsel %vm1116, %v440, 128
        %v1133 = vsel %vm1117, %v440, 128
        %v1134 = vsel %vm1118, %v440, 128
        %v1135 = vsel %vm1119, %v440, 128
        %v1136 = vsel %vm1120, %v440, 128
        %v1137 = vsel %vm1121, %v440, 128
        %v1138 = vsel %vm1122, %v440, 128
        %v1139 = vsel %vm1123, %v440, 128
        %v1140 = vsel %vm1124, %v440, 128
        %v1141 = vsel %vm1125, %v440, 128
        %v1142 = vsel %vm1126, %v440, 128
        %v1143 = vsel %vm1127, %v440, 128
        %v1144 = vsel %vm1128, %v440, 128
        %v1145 = vand.u32 %v1129, 65535
        %v1146 = vshra.s32 %v1129, 16
        %v1147 = vcvt.s32.f32 %v1145
        %v1148 = vcvt.s32.f32 %v1146
        %1149 = vmin.xlane.f32.xlu0 %v1148
        %v1150 = vpop.xlane.xlu0 %1149
        %vm1151 = vcmp.eq.f32.partialorder %v1148, %v1150
        %v1152 = vsel %vm1151, %v1147, inf
        %1153 = vmin.xlane.f32.xlu0 %v1152
        %v1154 = vpop.xlane.xlu0 %1153
        %v1155 = vcvt.f32.s32 %v1154
        %v1156 = vcvt.f32.s32 %v1150
        %v1157 = vshll.u32 %v1156, 16
        %v1158 = vadd.s32 %v1157, %v1155
        %v1159 = vand.u32 %v1130, 65535
        %v1160 = vshra.s32 %v1130, 16
        %v1161 = vcvt.s32.f32 %v1159
        %v1162 = vcvt.s32.f32 %v1160
        %1163 = vmin.xlane.f32.xlu0 %v1162
        %v1164 = vpop.xlane.xlu0 %1163
        %vm1165 = vcmp.eq.f32.partialorder %v1162, %v1164
        %v1166 = vsel %vm1165, %v1161, inf
        %1167 = vmin.xlane.f32.xlu0 %v1166
        %v1168 = vpop.xlane.xlu0 %1167
        %v1169 = vcvt.f32.s32 %v1168
        %v1170 = vcvt.f32.s32 %v1164
        %v1171 = vshll.u32 %v1170, 16
        %v1172 = vadd.s32 %v1171, %v1169
        %v1173 = vand.u32 %v1131, 65535
        %v1174 = vshra.s32 %v1131, 16
        %v1175 = vcvt.s32.f32 %v1173
        %v1176 = vcvt.s32.f32 %v1174
        %1177 = vmin.xlane.f32.xlu0 %v1176
        %v1178 = vpop.xlane.xlu0 %1177
        %vm1179 = vcmp.eq.f32.partialorder %v1176, %v1178
        %v1180 = vsel %vm1179, %v1175, inf
        %1181 = vmin.xlane.f32.xlu0 %v1180
        %v1182 = vpop.xlane.xlu0 %1181
        %v1183 = vcvt.f32.s32 %v1182
        %v1184 = vcvt.f32.s32 %v1178
        %v1185 = vshll.u32 %v1184, 16
        %v1186 = vadd.s32 %v1185, %v1183
        %v1187 = vand.u32 %v1132, 65535
        %v1188 = vshra.s32 %v1132, 16
        %v1189 = vcvt.s32.f32 %v1187
        %v1190 = vcvt.s32.f32 %v1188
        %1191 = vmin.xlane.f32.xlu0 %v1190
        %v1192 = vpop.xlane.xlu0 %1191
        %vm1193 = vcmp.eq.f32.partialorder %v1190, %v1192
        %v1194 = vsel %vm1193, %v1189, inf
        %1195 = vmin.xlane.f32.xlu0 %v1194
        %v1196 = vpop.xlane.xlu0 %1195
        %v1197 = vcvt.f32.s32 %v1196
        %v1198 = vcvt.f32.s32 %v1192
        %v1199 = vshll.u32 %v1198, 16
        %v1200 = vadd.s32 %v1199, %v1197
        %v1201 = vand.u32 %v1133, 65535
        %v1202 = vshra.s32 %v1133, 16
        %v1203 = vcvt.s32.f32 %v1201
        %v1204 = vcvt.s32.f32 %v1202
        %1205 = vmin.xlane.f32.xlu0 %v1204
        %v1206 = vpop.xlane.xlu0 %1205
        %vm1207 = vcmp.eq.f32.partialorder %v1204, %v1206
        %v1208 = vsel %vm1207, %v1203, inf
        %1209 = vmin.xlane.f32.xlu0 %v1208
        %v1210 = vpop.xlane.xlu0 %1209
        %v1211 = vcvt.f32.s32 %v1210
        %v1212 = vcvt.f32.s32 %v1206
        %v1213 = vshll.u32 %v1212, 16
        %v1214 = vadd.s32 %v1213, %v1211
        %v1215 = vand.u32 %v1134, 65535
        %v1216 = vshra.s32 %v1134, 16
        %v1217 = vcvt.s32.f32 %v1215
        %v1218 = vcvt.s32.f32 %v1216
        %1219 = vmin.xlane.f32.xlu0 %v1218
        %v1220 = vpop.xlane.xlu0 %1219
        %vm1221 = vcmp.eq.f32.partialorder %v1218, %v1220
        %v1222 = vsel %vm1221, %v1217, inf
        %1223 = vmin.xlane.f32.xlu0 %v1222
        %v1224 = vpop.xlane.xlu0 %1223
        %v1225 = vcvt.f32.s32 %v1224
        %v1226 = vcvt.f32.s32 %v1220
        %v1227 = vshll.u32 %v1226, 16
        %v1228 = vadd.s32 %v1227, %v1225
        %v1229 = vand.u32 %v1135, 65535
        %v1230 = vshra.s32 %v1135, 16
        %v1231 = vcvt.s32.f32 %v1229
        %v1232 = vcvt.s32.f32 %v1230
        %1233 = vmin.xlane.f32.xlu0 %v1232
        %v1234 = vpop.xlane.xlu0 %1233
        %vm1235 = vcmp.eq.f32.partialorder %v1232, %v1234
        %v1236 = vsel %vm1235, %v1231, inf
        %1237 = vmin.xlane.f32.xlu0 %v1236
        %v1238 = vpop.xlane.xlu0 %1237
        %v1239 = vcvt.f32.s32 %v1238
        %v1240 = vcvt.f32.s32 %v1234
        %v1241 = vshll.u32 %v1240, 16
        %v1242 = vadd.s32 %v1241, %v1239
        %v1243 = vand.u32 %v1136, 65535
        %v1244 = vshra.s32 %v1136, 16
        %v1245 = vcvt.s32.f32 %v1243
        %v1246 = vcvt.s32.f32 %v1244
        %1247 = vmin.xlane.f32.xlu0 %v1246
        %v1248 = vpop.xlane.xlu0 %1247
        %vm1249 = vcmp.eq.f32.partialorder %v1246, %v1248
        %v1250 = vsel %vm1249, %v1245, inf
        %1251 = vmin.xlane.f32.xlu0 %v1250
        %v1252 = vpop.xlane.xlu0 %1251
        %v1253 = vcvt.f32.s32 %v1252
        %v1254 = vcvt.f32.s32 %v1248
        %v1255 = vshll.u32 %v1254, 16
        %v1256 = vadd.s32 %v1255, %v1253
        %v1257 = vand.u32 %v1137, 65535
        %v1258 = vshra.s32 %v1137, 16
        %v1259 = vcvt.s32.f32 %v1257
        %v1260 = vcvt.s32.f32 %v1258
        %1261 = vmin.xlane.f32.xlu0 %v1260
        %v1262 = vpop.xlane.xlu0 %1261
        %vm1263 = vcmp.eq.f32.partialorder %v1260, %v1262
        %v1264 = vsel %vm1263, %v1259, inf
        %1265 = vmin.xlane.f32.xlu0 %v1264
        %v1266 = vpop.xlane.xlu0 %1265
        %v1267 = vcvt.f32.s32 %v1266
        %v1268 = vcvt.f32.s32 %v1262
        %v1269 = vshll.u32 %v1268, 16
        %v1270 = vadd.s32 %v1269, %v1267
        %v1271 = vand.u32 %v1138, 65535
        %v1272 = vshra.s32 %v1138, 16
        %v1273 = vcvt.s32.f32 %v1271
        %v1274 = vcvt.s32.f32 %v1272
        %1275 = vmin.xlane.f32.xlu0 %v1274
        %v1276 = vpop.xlane.xlu0 %1275
        %vm1277 = vcmp.eq.f32.partialorder %v1274, %v1276
        %v1278 = vsel %vm1277, %v1273, inf
        %1279 = vmin.xlane.f32.xlu0 %v1278
        %v1280 = vpop.xlane.xlu0 %1279
        %v1281 = vcvt.f32.s32 %v1280
        %v1282 = vcvt.f32.s32 %v1276
        %v1283 = vshll.u32 %v1282, 16
        %v1284 = vadd.s32 %v1283, %v1281
        %v1285 = vand.u32 %v1139, 65535
        %v1286 = vshra.s32 %v1139, 16
        %v1287 = vcvt.s32.f32 %v1285
        %v1288 = vcvt.s32.f32 %v1286
        %1289 = vmin.xlane.f32.xlu0 %v1288
        %v1290 = vpop.xlane.xlu0 %1289
        %vm1291 = vcmp.eq.f32.partialorder %v1288, %v1290
        %v1292 = vsel %vm1291, %v1287, inf
        %1293 = vmin.xlane.f32.xlu0 %v1292
        %v1294 = vpop.xlane.xlu0 %1293
        %v1295 = vcvt.f32.s32 %v1294
        %v1296 = vcvt.f32.s32 %v1290
        %v1297 = vshll.u32 %v1296, 16
        %v1298 = vadd.s32 %v1297, %v1295
        %v1299 = vand.u32 %v1140, 65535
        %v1300 = vshra.s32 %v1140, 16
        %v1301 = vcvt.s32.f32 %v1299
        %v1302 = vcvt.s32.f32 %v1300
        %1303 = vmin.xlane.f32.xlu0 %v1302
        %v1304 = vpop.xlane.xlu0 %1303
        %vm1305 = vcmp.eq.f32.partialorder %v1302, %v1304
        %v1306 = vsel %vm1305, %v1301, inf
        %1307 = vmin.xlane.f32.xlu0 %v1306
        %v1308 = vpop.xlane.xlu0 %1307
        %v1309 = vcvt.f32.s32 %v1308
        %v1310 = vcvt.f32.s32 %v1304
        %v1311 = vshll.u32 %v1310, 16
        %v1312 = vadd.s32 %v1311, %v1309
        %v1313 = vand.u32 %v1141, 65535
        %v1314 = vshra.s32 %v1141, 16
        %v1315 = vcvt.s32.f32 %v1313
        %v1316 = vcvt.s32.f32 %v1314
        %1317 = vmin.xlane.f32.xlu0 %v1316
        %v1318 = vpop.xlane.xlu0 %1317
        %vm1319 = vcmp.eq.f32.partialorder %v1316, %v1318
        %v1320 = vsel %vm1319, %v1315, inf
        %1321 = vmin.xlane.f32.xlu0 %v1320
        %v1322 = vpop.xlane.xlu0 %1321
        %v1323 = vcvt.f32.s32 %v1322
        %v1324 = vcvt.f32.s32 %v1318
        %v1325 = vshll.u32 %v1324, 16
        %v1326 = vadd.s32 %v1325, %v1323
        %v1327 = vand.u32 %v1142, 65535
        %v1328 = vshra.s32 %v1142, 16
        %v1329 = vcvt.s32.f32 %v1327
        %v1330 = vcvt.s32.f32 %v1328
        %1331 = vmin.xlane.f32.xlu0 %v1330
        %v1332 = vpop.xlane.xlu0 %1331
        %vm1333 = vcmp.eq.f32.partialorder %v1330, %v1332
        %v1334 = vsel %vm1333, %v1329, inf
        %1335 = vmin.xlane.f32.xlu0 %v1334
        %v1336 = vpop.xlane.xlu0 %1335
        %v1337 = vcvt.f32.s32 %v1336
        %v1338 = vcvt.f32.s32 %v1332
        %v1339 = vshll.u32 %v1338, 16
        %v1340 = vadd.s32 %v1339, %v1337
        %v1341 = vand.u32 %v1143, 65535
        %v1342 = vshra.s32 %v1143, 16
        %v1343 = vcvt.s32.f32 %v1341
        %v1344 = vcvt.s32.f32 %v1342
        %1345 = vmin.xlane.f32.xlu0 %v1344
        %v1346 = vpop.xlane.xlu0 %1345
        %vm1347 = vcmp.eq.f32.partialorder %v1344, %v1346
        %v1348 = vsel %vm1347, %v1343, inf
        %1349 = vmin.xlane.f32.xlu0 %v1348
        %v1350 = vpop.xlane.xlu0 %1349
        %v1351 = vcvt.f32.s32 %v1350
        %v1352 = vcvt.f32.s32 %v1346
        %v1353 = vshll.u32 %v1352, 16
        %v1354 = vadd.s32 %v1353, %v1351
        %v1355 = vand.u32 %v1144, 65535
        %v1356 = vshra.s32 %v1144, 16
        %v1357 = vcvt.s32.f32 %v1355
        %v1358 = vcvt.s32.f32 %v1356
        %1359 = vmin.xlane.f32.xlu0 %v1358
        %v1360 = vpop.xlane.xlu0 %1359
        %vm1361 = vcmp.eq.f32.partialorder %v1358, %v1360
        %v1362 = vsel %vm1361, %v1357, inf
        %1363 = vmin.xlane.f32.xlu0 %v1362
        %v1364 = vpop.xlane.xlu0 %1363
        %v1365 = vcvt.f32.s32 %v1364
        %v1366 = vcvt.f32.s32 %v1360
        %v1367 = vshll.u32 %v1366, 16
        %v1368 = vadd.s32 %v1367, %v1365
        %vm1369 = vcmp.eq.s32.totalorder %v440, %v1158
        %vm1370 = vcmp.eq.s32.totalorder %v440, %v1172
        %vm1371 = vcmp.eq.s32.totalorder %v440, %v1186
        %vm1372 = vcmp.eq.s32.totalorder %v440, %v1200
        %vm1373 = vcmp.eq.s32.totalorder %v440, %v1214
        %vm1374 = vcmp.eq.s32.totalorder %v440, %v1228
        %vm1375 = vcmp.eq.s32.totalorder %v440, %v1242
        %vm1376 = vcmp.eq.s32.totalorder %v440, %v1256
        %vm1377 = vcmp.eq.s32.totalorder %v440, %v1270
        %vm1378 = vcmp.eq.s32.totalorder %v440, %v1284
        %vm1379 = vcmp.eq.s32.totalorder %v440, %v1298
        %vm1380 = vcmp.eq.s32.totalorder %v440, %v1312
        %vm1381 = vcmp.eq.s32.totalorder %v440, %v1326
        %vm1382 = vcmp.eq.s32.totalorder %v440, %v1340
        %vm1383 = vcmp.eq.s32.totalorder %v440, %v1354
        %vm1384 = vcmp.eq.s32.totalorder %v440, %v1368
        %v1385 = vsel %vm1369, -inf, %v1065
        %v1386 = vsel %vm1370, -inf, %v1066
        %v1387 = vsel %vm1371, -inf, %v1067
        %v1388 = vsel %vm1372, -inf, %v1068
        %v1389 = vsel %vm1373, -inf, %v1069
        %v1390 = vsel %vm1374, -inf, %v1070
        %v1391 = vsel %vm1375, -inf, %v1071
        %v1392 = vsel %vm1376, -inf, %v1072
        %v1393 = vsel %vm1377, -inf, %v1073
        %v1394 = vsel %vm1378, -inf, %v1074
        %v1395 = vsel %vm1379, -inf, %v1075
        %v1396 = vsel %vm1380, -inf, %v1076
        %v1397 = vsel %vm1381, -inf, %v1077
        %v1398 = vsel %vm1382, -inf, %v1078
        %v1399 = vsel %vm1383, -inf, %v1079
        %v1400 = vsel %vm1384, -inf, %v1080
        %1401 = vmax.xlane.f32.xlu0 %v1385
        %v1402 = vpop.xlane.xlu0 %1401
        %1403 = vmax.xlane.f32.xlu0 %v1386
        %v1404 = vpop.xlane.xlu0 %1403
        %1405 = vmax.xlane.f32.xlu0 %v1387
        %v1406 = vpop.xlane.xlu0 %1405
        %1407 = vmax.xlane.f32.xlu0 %v1388
        %v1408 = vpop.xlane.xlu0 %1407
        %1409 = vmax.xlane.f32.xlu0 %v1389
        %v1410 = vpop.xlane.xlu0 %1409
        %1411 = vmax.xlane.f32.xlu0 %v1390
        %v1412 = vpop.xlane.xlu0 %1411
        %1413 = vmax.xlane.f32.xlu0 %v1391
        %v1414 = vpop.xlane.xlu0 %1413
        %1415 = vmax.xlane.f32.xlu0 %v1392
        %v1416 = vpop.xlane.xlu0 %1415
        %1417 = vmax.xlane.f32.xlu0 %v1393
        %v1418 = vpop.xlane.xlu0 %1417
        %1419 = vmax.xlane.f32.xlu0 %v1394
        %v1420 = vpop.xlane.xlu0 %1419
        %1421 = vmax.xlane.f32.xlu0 %v1395
        %v1422 = vpop.xlane.xlu0 %1421
        %1423 = vmax.xlane.f32.xlu0 %v1396
        %v1424 = vpop.xlane.xlu0 %1423
        %1425 = vmax.xlane.f32.xlu0 %v1397
        %v1426 = vpop.xlane.xlu0 %1425
        %1427 = vmax.xlane.f32.xlu0 %v1398
        %v1428 = vpop.xlane.xlu0 %1427
        %1429 = vmax.xlane.f32.xlu0 %v1399
        %v1430 = vpop.xlane.xlu0 %1429
        %1431 = vmax.xlane.f32.xlu0 %v1400
        %v1432 = vpop.xlane.xlu0 %1431
        %vm1433 = vcmp.eq.f32.partialorder %v1385, %v1402
        %vm1434 = vcmp.eq.f32.partialorder %v1386, %v1404
        %vm1435 = vcmp.eq.f32.partialorder %v1387, %v1406
        %vm1436 = vcmp.eq.f32.partialorder %v1388, %v1408
        %vm1437 = vcmp.eq.f32.partialorder %v1389, %v1410
        %vm1438 = vcmp.eq.f32.partialorder %v1390, %v1412
        %vm1439 = vcmp.eq.f32.partialorder %v1391, %v1414
        %vm1440 = vcmp.eq.f32.partialorder %v1392, %v1416
        %vm1441 = vcmp.eq.f32.partialorder %v1393, %v1418
        %vm1442 = vcmp.eq.f32.partialorder %v1394, %v1420
        %vm1443 = vcmp.eq.f32.partialorder %v1395, %v1422
        %vm1444 = vcmp.eq.f32.partialorder %v1396, %v1424
        %vm1445 = vcmp.eq.f32.partialorder %v1397, %v1426
        %vm1446 = vcmp.eq.f32.partialorder %v1398, %v1428
        %vm1447 = vcmp.eq.f32.partialorder %v1399, %v1430
        %vm1448 = vcmp.eq.f32.partialorder %v1400, %v1432
        %v1449 = vsel %vm1433, %v440, 128
        %v1450 = vsel %vm1434, %v440, 128
        %v1451 = vsel %vm1435, %v440, 128
        %v1452 = vsel %vm1436, %v440, 128
        %v1453 = vsel %vm1437, %v440, 128
        %v1454 = vsel %vm1438, %v440, 128
        %v1455 = vsel %vm1439, %v440, 128
        %v1456 = vsel %vm1440, %v440, 128
        %v1457 = vsel %vm1441, %v440, 128
        %v1458 = vsel %vm1442, %v440, 128
        %v1459 = vsel %vm1443, %v440, 128
        %v1460 = vsel %vm1444, %v440, 128
        %v1461 = vsel %vm1445, %v440, 128
        %v1462 = vsel %vm1446, %v440, 128
        %v1463 = vsel %vm1447, %v440, 128
        %v1464 = vsel %vm1448, %v440, 128
        %v1465 = vand.u32 %v1449, 65535
        %v1466 = vshra.s32 %v1449, 16
        %v1467 = vcvt.s32.f32 %v1465
        %v1468 = vcvt.s32.f32 %v1466
        %1469 = vmin.xlane.f32.xlu0 %v1468
        %v1470 = vpop.xlane.xlu0 %1469
        %vm1471 = vcmp.eq.f32.partialorder %v1468, %v1470
        %v1472 = vsel %vm1471, %v1467, inf
        %1473 = vmin.xlane.f32.xlu0 %v1472
        %v1474 = vpop.xlane.xlu0 %1473
        %v1475 = vcvt.f32.s32 %v1474
        %v1476 = vcvt.f32.s32 %v1470
        %v1477 = vshll.u32 %v1476, 16
        %v1478 = vadd.s32 %v1477, %v1475
        %v1479 = vand.u32 %v1450, 65535
        %v1480 = vshra.s32 %v1450, 16
        %v1481 = vcvt.s32.f32 %v1479
        %v1482 = vcvt.s32.f32 %v1480
        %1483 = vmin.xlane.f32.xlu0 %v1482
        %v1484 = vpop.xlane.xlu0 %1483
        %vm1485 = vcmp.eq.f32.partialorder %v1482, %v1484
        %v1486 = vsel %vm1485, %v1481, inf
        %1487 = vmin.xlane.f32.xlu0 %v1486
        %v1488 = vpop.xlane.xlu0 %1487
        %v1489 = vcvt.f32.s32 %v1488
        %v1490 = vcvt.f32.s32 %v1484
        %v1491 = vshll.u32 %v1490, 16
        %v1492 = vadd.s32 %v1491, %v1489
        %v1493 = vand.u32 %v1451, 65535
        %v1494 = vshra.s32 %v1451, 16
        %v1495 = vcvt.s32.f32 %v1493
        %v1496 = vcvt.s32.f32 %v1494
        %1497 = vmin.xlane.f32.xlu0 %v1496
        %v1498 = vpop.xlane.xlu0 %1497
        %vm1499 = vcmp.eq.f32.partialorder %v1496, %v1498
        %v1500 = vsel %vm1499, %v1495, inf
        %1501 = vmin.xlane.f32.xlu0 %v1500
        %v1502 = vpop.xlane.xlu0 %1501
        %v1503 = vcvt.f32.s32 %v1502
        %v1504 = vcvt.f32.s32 %v1498
        %v1505 = vshll.u32 %v1504, 16
        %v1506 = vadd.s32 %v1505, %v1503
        %v1507 = vand.u32 %v1452, 65535
        %v1508 = vshra.s32 %v1452, 16
        %v1509 = vcvt.s32.f32 %v1507
        %v1510 = vcvt.s32.f32 %v1508
        %1511 = vmin.xlane.f32.xlu0 %v1510
        %v1512 = vpop.xlane.xlu0 %1511
        %vm1513 = vcmp.eq.f32.partialorder %v1510, %v1512
        %v1514 = vsel %vm1513, %v1509, inf
        %1515 = vmin.xlane.f32.xlu0 %v1514
        %v1516 = vpop.xlane.xlu0 %1515
        %v1517 = vcvt.f32.s32 %v1516
        %v1518 = vcvt.f32.s32 %v1512
        %v1519 = vshll.u32 %v1518, 16
        %v1520 = vadd.s32 %v1519, %v1517
        %v1521 = vand.u32 %v1453, 65535
        %v1522 = vshra.s32 %v1453, 16
        %v1523 = vcvt.s32.f32 %v1521
        %v1524 = vcvt.s32.f32 %v1522
        %1525 = vmin.xlane.f32.xlu0 %v1524
        %v1526 = vpop.xlane.xlu0 %1525
        %vm1527 = vcmp.eq.f32.partialorder %v1524, %v1526
        %v1528 = vsel %vm1527, %v1523, inf
        %1529 = vmin.xlane.f32.xlu0 %v1528
        %v1530 = vpop.xlane.xlu0 %1529
        %v1531 = vcvt.f32.s32 %v1530
        %v1532 = vcvt.f32.s32 %v1526
        %v1533 = vshll.u32 %v1532, 16
        %v1534 = vadd.s32 %v1533, %v1531
        %v1535 = vand.u32 %v1454, 65535
        %v1536 = vshra.s32 %v1454, 16
        %v1537 = vcvt.s32.f32 %v1535
        %v1538 = vcvt.s32.f32 %v1536
        %1539 = vmin.xlane.f32.xlu0 %v1538
        %v1540 = vpop.xlane.xlu0 %1539
        %vm1541 = vcmp.eq.f32.partialorder %v1538, %v1540
        %v1542 = vsel %vm1541, %v1537, inf
        %1543 = vmin.xlane.f32.xlu0 %v1542
        %v1544 = vpop.xlane.xlu0 %1543
        %v1545 = vcvt.f32.s32 %v1544
        %v1546 = vcvt.f32.s32 %v1540
        %v1547 = vshll.u32 %v1546, 16
        %v1548 = vadd.s32 %v1547, %v1545
        %v1549 = vand.u32 %v1455, 65535
        %v1550 = vshra.s32 %v1455, 16
        %v1551 = vcvt.s32.f32 %v1549
        %v1552 = vcvt.s32.f32 %v1550
        %1553 = vmin.xlane.f32.xlu0 %v1552
        %v1554 = vpop.xlane.xlu0 %1553
        %vm1555 = vcmp.eq.f32.partialorder %v1552, %v1554
        %v1556 = vsel %vm1555, %v1551, inf
        %1557 = vmin.xlane.f32.xlu0 %v1556
        %v1558 = vpop.xlane.xlu0 %1557
        %v1559 = vcvt.f32.s32 %v1558
        %v1560 = vcvt.f32.s32 %v1554
        %v1561 = vshll.u32 %v1560, 16
        %v1562 = vadd.s32 %v1561, %v1559
        %v1563 = vand.u32 %v1456, 65535
        %v1564 = vshra.s32 %v1456, 16
        %v1565 = vcvt.s32.f32 %v1563
        %v1566 = vcvt.s32.f32 %v1564
        %1567 = vmin.xlane.f32.xlu0 %v1566
        %v1568 = vpop.xlane.xlu0 %1567
        %vm1569 = vcmp.eq.f32.partialorder %v1566, %v1568
        %v1570 = vsel %vm1569, %v1565, inf
        %1571 = vmin.xlane.f32.xlu0 %v1570
        %v1572 = vpop.xlane.xlu0 %1571
        %v1573 = vcvt.f32.s32 %v1572
        %v1574 = vcvt.f32.s32 %v1568
        %v1575 = vshll.u32 %v1574, 16
        %v1576 = vadd.s32 %v1575, %v1573
        %v1577 = vand.u32 %v1457, 65535
        %v1578 = vshra.s32 %v1457, 16
        %v1579 = vcvt.s32.f32 %v1577
        %v1580 = vcvt.s32.f32 %v1578
        %1581 = vmin.xlane.f32.xlu0 %v1580
        %v1582 = vpop.xlane.xlu0 %1581
        %vm1583 = vcmp.eq.f32.partialorder %v1580, %v1582
        %v1584 = vsel %vm1583, %v1579, inf
        %1585 = vmin.xlane.f32.xlu0 %v1584
        %v1586 = vpop.xlane.xlu0 %1585
        %v1587 = vcvt.f32.s32 %v1586
        %v1588 = vcvt.f32.s32 %v1582
        %v1589 = vshll.u32 %v1588, 16
        %v1590 = vadd.s32 %v1589, %v1587
        %v1591 = vand.u32 %v1458, 65535
        %v1592 = vshra.s32 %v1458, 16
        %v1593 = vcvt.s32.f32 %v1591
        %v1594 = vcvt.s32.f32 %v1592
        %1595 = vmin.xlane.f32.xlu0 %v1594
        %v1596 = vpop.xlane.xlu0 %1595
        %vm1597 = vcmp.eq.f32.partialorder %v1594, %v1596
        %v1598 = vsel %vm1597, %v1593, inf
        %1599 = vmin.xlane.f32.xlu0 %v1598
        %v1600 = vpop.xlane.xlu0 %1599
        %v1601 = vcvt.f32.s32 %v1600
        %v1602 = vcvt.f32.s32 %v1596
        %v1603 = vshll.u32 %v1602, 16
        %v1604 = vadd.s32 %v1603, %v1601
        %v1605 = vand.u32 %v1459, 65535
        %v1606 = vshra.s32 %v1459, 16
        %v1607 = vcvt.s32.f32 %v1605
        %v1608 = vcvt.s32.f32 %v1606
        %1609 = vmin.xlane.f32.xlu0 %v1608
        %v1610 = vpop.xlane.xlu0 %1609
        %vm1611 = vcmp.eq.f32.partialorder %v1608, %v1610
        %v1612 = vsel %vm1611, %v1607, inf
        %1613 = vmin.xlane.f32.xlu0 %v1612
        %v1614 = vpop.xlane.xlu0 %1613
        %v1615 = vcvt.f32.s32 %v1614
        %v1616 = vcvt.f32.s32 %v1610
        %v1617 = vshll.u32 %v1616, 16
        %v1618 = vadd.s32 %v1617, %v1615
        %v1619 = vand.u32 %v1460, 65535
        %v1620 = vshra.s32 %v1460, 16
        %v1621 = vcvt.s32.f32 %v1619
        %v1622 = vcvt.s32.f32 %v1620
        %1623 = vmin.xlane.f32.xlu0 %v1622
        %v1624 = vpop.xlane.xlu0 %1623
        %vm1625 = vcmp.eq.f32.partialorder %v1622, %v1624
        %v1626 = vsel %vm1625, %v1621, inf
        %1627 = vmin.xlane.f32.xlu0 %v1626
        %v1628 = vpop.xlane.xlu0 %1627
        %v1629 = vcvt.f32.s32 %v1628
        %v1630 = vcvt.f32.s32 %v1624
        %v1631 = vshll.u32 %v1630, 16
        %v1632 = vadd.s32 %v1631, %v1629
        %v1633 = vand.u32 %v1461, 65535
        %v1634 = vshra.s32 %v1461, 16
        %v1635 = vcvt.s32.f32 %v1633
        %v1636 = vcvt.s32.f32 %v1634
        %1637 = vmin.xlane.f32.xlu0 %v1636
        %v1638 = vpop.xlane.xlu0 %1637
        %vm1639 = vcmp.eq.f32.partialorder %v1636, %v1638
        %v1640 = vsel %vm1639, %v1635, inf
        %1641 = vmin.xlane.f32.xlu0 %v1640
        %v1642 = vpop.xlane.xlu0 %1641
        %v1643 = vcvt.f32.s32 %v1642
        %v1644 = vcvt.f32.s32 %v1638
        %v1645 = vshll.u32 %v1644, 16
        %v1646 = vadd.s32 %v1645, %v1643
        %v1647 = vand.u32 %v1462, 65535
        %v1648 = vshra.s32 %v1462, 16
        %v1649 = vcvt.s32.f32 %v1647
        %v1650 = vcvt.s32.f32 %v1648
        %1651 = vmin.xlane.f32.xlu0 %v1650
        %v1652 = vpop.xlane.xlu0 %1651
        %vm1653 = vcmp.eq.f32.partialorder %v1650, %v1652
        %v1654 = vsel %vm1653, %v1649, inf
        %1655 = vmin.xlane.f32.xlu0 %v1654
        %v1656 = vpop.xlane.xlu0 %1655
        %v1657 = vcvt.f32.s32 %v1656
        %v1658 = vcvt.f32.s32 %v1652
        %v1659 = vshll.u32 %v1658, 16
        %v1660 = vadd.s32 %v1659, %v1657
        %v1661 = vand.u32 %v1463, 65535
        %v1662 = vshra.s32 %v1463, 16
        %v1663 = vcvt.s32.f32 %v1661
        %v1664 = vcvt.s32.f32 %v1662
        %1665 = vmin.xlane.f32.xlu0 %v1664
        %v1666 = vpop.xlane.xlu0 %1665
        %vm1667 = vcmp.eq.f32.partialorder %v1664, %v1666
        %v1668 = vsel %vm1667, %v1663, inf
        %1669 = vmin.xlane.f32.xlu0 %v1668
        %v1670 = vpop.xlane.xlu0 %1669
        %v1671 = vcvt.f32.s32 %v1670
        %v1672 = vcvt.f32.s32 %v1666
        %v1673 = vshll.u32 %v1672, 16
        %v1674 = vadd.s32 %v1673, %v1671
        %v1675 = vand.u32 %v1464, 65535
        %v1676 = vshra.s32 %v1464, 16
        %v1677 = vcvt.s32.f32 %v1675
        %v1678 = vcvt.s32.f32 %v1676
        %1679 = vmin.xlane.f32.xlu0 %v1678
        %v1680 = vpop.xlane.xlu0 %1679
        %vm1681 = vcmp.eq.f32.partialorder %v1678, %v1680
        %v1682 = vsel %vm1681, %v1677, inf
        %1683 = vmin.xlane.f32.xlu0 %v1682
        %v1684 = vpop.xlane.xlu0 %1683
        %v1685 = vcvt.f32.s32 %v1684
        %v1686 = vcvt.f32.s32 %v1680
        %v1687 = vshll.u32 %v1686, 16
        %v1688 = vadd.s32 %v1687, %v1685
        %vm1689 = vcmp.eq.s32.totalorder %v440, %v1478
        %vm1690 = vcmp.eq.s32.totalorder %v440, %v1492
        %vm1691 = vcmp.eq.s32.totalorder %v440, %v1506
        %vm1692 = vcmp.eq.s32.totalorder %v440, %v1520
        %vm1693 = vcmp.eq.s32.totalorder %v440, %v1534
        %vm1694 = vcmp.eq.s32.totalorder %v440, %v1548
        %vm1695 = vcmp.eq.s32.totalorder %v440, %v1562
        %vm1696 = vcmp.eq.s32.totalorder %v440, %v1576
        %vm1697 = vcmp.eq.s32.totalorder %v440, %v1590
        %vm1698 = vcmp.eq.s32.totalorder %v440, %v1604
        %vm1699 = vcmp.eq.s32.totalorder %v440, %v1618
        %vm1700 = vcmp.eq.s32.totalorder %v440, %v1632
        %vm1701 = vcmp.eq.s32.totalorder %v440, %v1646
        %vm1702 = vcmp.eq.s32.totalorder %v440, %v1660
        %vm1703 = vcmp.eq.s32.totalorder %v440, %v1674
        %vm1704 = vcmp.eq.s32.totalorder %v440, %v1688
        %v1705 = vsel %vm1689, -inf, %v1385
        %v1706 = vsel %vm1690, -inf, %v1386
        %v1707 = vsel %vm1691, -inf, %v1387
        %v1708 = vsel %vm1692, -inf, %v1388
        %v1709 = vsel %vm1693, -inf, %v1389
        %v1710 = vsel %vm1694, -inf, %v1390
        %v1711 = vsel %vm1695, -inf, %v1391
        %v1712 = vsel %vm1696, -inf, %v1392
        %v1713 = vsel %vm1697, -inf, %v1393
        %v1714 = vsel %vm1698, -inf, %v1394
        %v1715 = vsel %vm1699, -inf, %v1395
        %v1716 = vsel %vm1700, -inf, %v1396
        %v1717 = vsel %vm1701, -inf, %v1397
        %v1718 = vsel %vm1702, -inf, %v1398
        %v1719 = vsel %vm1703, -inf, %v1399
        %v1720 = vsel %vm1704, -inf, %v1400
        %1721 = vmax.xlane.f32.xlu0 %v1705
        %v1722 = vpop.xlane.xlu0 %1721
        %1723 = vmax.xlane.f32.xlu0 %v1706
        %v1724 = vpop.xlane.xlu0 %1723
        %1725 = vmax.xlane.f32.xlu0 %v1707
        %v1726 = vpop.xlane.xlu0 %1725
        %1727 = vmax.xlane.f32.xlu0 %v1708
        %v1728 = vpop.xlane.xlu0 %1727
        %1729 = vmax.xlane.f32.xlu0 %v1709
        %v1730 = vpop.xlane.xlu0 %1729
        %1731 = vmax.xlane.f32.xlu0 %v1710
        %v1732 = vpop.xlane.xlu0 %1731
        %1733 = vmax.xlane.f32.xlu0 %v1711
        %v1734 = vpop.xlane.xlu0 %1733
        %1735 = vmax.xlane.f32.xlu0 %v1712
        %v1736 = vpop.xlane.xlu0 %1735
        %1737 = vmax.xlane.f32.xlu0 %v1713
        %v1738 = vpop.xlane.xlu0 %1737
        %1739 = vmax.xlane.f32.xlu0 %v1714
        %v1740 = vpop.xlane.xlu0 %1739
        %1741 = vmax.xlane.f32.xlu0 %v1715
        %v1742 = vpop.xlane.xlu0 %1741
        %1743 = vmax.xlane.f32.xlu0 %v1716
        %v1744 = vpop.xlane.xlu0 %1743
        %1745 = vmax.xlane.f32.xlu0 %v1717
        %v1746 = vpop.xlane.xlu0 %1745
        %1747 = vmax.xlane.f32.xlu0 %v1718
        %v1748 = vpop.xlane.xlu0 %1747
        %1749 = vmax.xlane.f32.xlu0 %v1719
        %v1750 = vpop.xlane.xlu0 %1749
        %1751 = vmax.xlane.f32.xlu0 %v1720
        %v1752 = vpop.xlane.xlu0 %1751
        %vm1753 = vcmp.eq.f32.partialorder %v1705, %v1722
        %vm1754 = vcmp.eq.f32.partialorder %v1706, %v1724
        %vm1755 = vcmp.eq.f32.partialorder %v1707, %v1726
        %vm1756 = vcmp.eq.f32.partialorder %v1708, %v1728
        %vm1757 = vcmp.eq.f32.partialorder %v1709, %v1730
        %vm1758 = vcmp.eq.f32.partialorder %v1710, %v1732
        %vm1759 = vcmp.eq.f32.partialorder %v1711, %v1734
        %vm1760 = vcmp.eq.f32.partialorder %v1712, %v1736
        %vm1761 = vcmp.eq.f32.partialorder %v1713, %v1738
        %vm1762 = vcmp.eq.f32.partialorder %v1714, %v1740
        %vm1763 = vcmp.eq.f32.partialorder %v1715, %v1742
        %vm1764 = vcmp.eq.f32.partialorder %v1716, %v1744
        %vm1765 = vcmp.eq.f32.partialorder %v1717, %v1746
        %vm1766 = vcmp.eq.f32.partialorder %v1718, %v1748
        %vm1767 = vcmp.eq.f32.partialorder %v1719, %v1750
        %vm1768 = vcmp.eq.f32.partialorder %v1720, %v1752
        %v1769 = vsel %vm1753, %v440, 128
        %v1770 = vsel %vm1754, %v440, 128
        %v1771 = vsel %vm1755, %v440, 128
        %v1772 = vsel %vm1756, %v440, 128
        %v1773 = vsel %vm1757, %v440, 128
        %v1774 = vsel %vm1758, %v440, 128
        %v1775 = vsel %vm1759, %v440, 128
        %v1776 = vsel %vm1760, %v440, 128
        %v1777 = vsel %vm1761, %v440, 128
        %v1778 = vsel %vm1762, %v440, 128
        %v1779 = vsel %vm1763, %v440, 128
        %v1780 = vsel %vm1764, %v440, 128
        %v1781 = vsel %vm1765, %v440, 128
        %v1782 = vsel %vm1766, %v440, 128
        %v1783 = vsel %vm1767, %v440, 128
        %v1784 = vsel %vm1768, %v440, 128
        %v1785 = vand.u32 %v1769, 65535
        %v1786 = vshra.s32 %v1769, 16
        %v1787 = vcvt.s32.f32 %v1785
        %v1788 = vcvt.s32.f32 %v1786
        %1789 = vmin.xlane.f32.xlu0 %v1788
        %v1790 = vpop.xlane.xlu0 %1789
        %vm1791 = vcmp.eq.f32.partialorder %v1788, %v1790
        %v1792 = vsel %vm1791, %v1787, inf
        %1793 = vmin.xlane.f32.xlu0 %v1792
        %v1794 = vpop.xlane.xlu0 %1793
        %v1795 = vcvt.f32.s32 %v1794
        %v1796 = vcvt.f32.s32 %v1790
        %v1797 = vshll.u32 %v1796, 16
        %v1798 = vadd.s32 %v1797, %v1795
        %v1799 = vand.u32 %v1770, 65535
        %v1800 = vshra.s32 %v1770, 16
        %v1801 = vcvt.s32.f32 %v1799
        %v1802 = vcvt.s32.f32 %v1800
        %1803 = vmin.xlane.f32.xlu0 %v1802
        %v1804 = vpop.xlane.xlu0 %1803
        %vm1805 = vcmp.eq.f32.partialorder %v1802, %v1804
        %v1806 = vsel %vm1805, %v1801, inf
        %1807 = vmin.xlane.f32.xlu0 %v1806
        %v1808 = vpop.xlane.xlu0 %1807
        %v1809 = vcvt.f32.s32 %v1808
        %v1810 = vcvt.f32.s32 %v1804
        %v1811 = vshll.u32 %v1810, 16
        %v1812 = vadd.s32 %v1811, %v1809
        %v1813 = vand.u32 %v1771, 65535
        %v1814 = vshra.s32 %v1771, 16
        %v1815 = vcvt.s32.f32 %v1813
        %v1816 = vcvt.s32.f32 %v1814
        %1817 = vmin.xlane.f32.xlu0 %v1816
        %v1818 = vpop.xlane.xlu0 %1817
        %vm1819 = vcmp.eq.f32.partialorder %v1816, %v1818
        %v1820 = vsel %vm1819, %v1815, inf
        %1821 = vmin.xlane.f32.xlu0 %v1820
        %v1822 = vpop.xlane.xlu0 %1821
        %v1823 = vcvt.f32.s32 %v1822
        %v1824 = vcvt.f32.s32 %v1818
        %v1825 = vshll.u32 %v1824, 16
        %v1826 = vadd.s32 %v1825, %v1823
        %v1827 = vand.u32 %v1772, 65535
        %v1828 = vshra.s32 %v1772, 16
        %v1829 = vcvt.s32.f32 %v1827
        %v1830 = vcvt.s32.f32 %v1828
        %1831 = vmin.xlane.f32.xlu0 %v1830
        %v1832 = vpop.xlane.xlu0 %1831
        %vm1833 = vcmp.eq.f32.partialorder %v1830, %v1832
        %v1834 = vsel %vm1833, %v1829, inf
        %1835 = vmin.xlane.f32.xlu0 %v1834
        %v1836 = vpop.xlane.xlu0 %1835
        %v1837 = vcvt.f32.s32 %v1836
        %v1838 = vcvt.f32.s32 %v1832
        %v1839 = vshll.u32 %v1838, 16
        %v1840 = vadd.s32 %v1839, %v1837
        %v1841 = vand.u32 %v1773, 65535
        %v1842 = vshra.s32 %v1773, 16
        %v1843 = vcvt.s32.f32 %v1841
        %v1844 = vcvt.s32.f32 %v1842
        %1845 = vmin.xlane.f32.xlu0 %v1844
        %v1846 = vpop.xlane.xlu0 %1845
        %vm1847 = vcmp.eq.f32.partialorder %v1844, %v1846
        %v1848 = vsel %vm1847, %v1843, inf
        %1849 = vmin.xlane.f32.xlu0 %v1848
        %v1850 = vpop.xlane.xlu0 %1849
        %v1851 = vcvt.f32.s32 %v1850
        %v1852 = vcvt.f32.s32 %v1846
        %v1853 = vshll.u32 %v1852, 16
        %v1854 = vadd.s32 %v1853, %v1851
        %v1855 = vand.u32 %v1774, 65535
        %v1856 = vshra.s32 %v1774, 16
        %v1857 = vcvt.s32.f32 %v1855
        %v1858 = vcvt.s32.f32 %v1856
        %1859 = vmin.xlane.f32.xlu0 %v1858
        %v1860 = vpop.xlane.xlu0 %1859
        %vm1861 = vcmp.eq.f32.partialorder %v1858, %v1860
        %v1862 = vsel %vm1861, %v1857, inf
        %1863 = vmin.xlane.f32.xlu0 %v1862
        %v1864 = vpop.xlane.xlu0 %1863
        %v1865 = vcvt.f32.s32 %v1864
        %v1866 = vcvt.f32.s32 %v1860
        %v1867 = vshll.u32 %v1866, 16
        %v1868 = vadd.s32 %v1867, %v1865
        %v1869 = vand.u32 %v1775, 65535
        %v1870 = vshra.s32 %v1775, 16
        %v1871 = vcvt.s32.f32 %v1869
        %v1872 = vcvt.s32.f32 %v1870
        %1873 = vmin.xlane.f32.xlu0 %v1872
        %v1874 = vpop.xlane.xlu0 %1873
        %vm1875 = vcmp.eq.f32.partialorder %v1872, %v1874
        %v1876 = vsel %vm1875, %v1871, inf
        %1877 = vmin.xlane.f32.xlu0 %v1876
        %v1878 = vpop.xlane.xlu0 %1877
        %v1879 = vcvt.f32.s32 %v1878
        %v1880 = vcvt.f32.s32 %v1874
        %v1881 = vshll.u32 %v1880, 16
        %v1882 = vadd.s32 %v1881, %v1879
        %v1883 = vand.u32 %v1776, 65535
        %v1884 = vshra.s32 %v1776, 16
        %v1885 = vcvt.s32.f32 %v1883
        %v1886 = vcvt.s32.f32 %v1884
        %1887 = vmin.xlane.f32.xlu0 %v1886
        %v1888 = vpop.xlane.xlu0 %1887
        %vm1889 = vcmp.eq.f32.partialorder %v1886, %v1888
        %v1890 = vsel %vm1889, %v1885, inf
        %1891 = vmin.xlane.f32.xlu0 %v1890
        %v1892 = vpop.xlane.xlu0 %1891
        %v1893 = vcvt.f32.s32 %v1892
        %v1894 = vcvt.f32.s32 %v1888
        %v1895 = vshll.u32 %v1894, 16
        %v1896 = vadd.s32 %v1895, %v1893
        %v1897 = vand.u32 %v1777, 65535
        %v1898 = vshra.s32 %v1777, 16
        %v1899 = vcvt.s32.f32 %v1897
        %v1900 = vcvt.s32.f32 %v1898
        %1901 = vmin.xlane.f32.xlu0 %v1900
        %v1902 = vpop.xlane.xlu0 %1901
        %vm1903 = vcmp.eq.f32.partialorder %v1900, %v1902
        %v1904 = vsel %vm1903, %v1899, inf
        %1905 = vmin.xlane.f32.xlu0 %v1904
        %v1906 = vpop.xlane.xlu0 %1905
        %v1907 = vcvt.f32.s32 %v1906
        %v1908 = vcvt.f32.s32 %v1902
        %v1909 = vshll.u32 %v1908, 16
        %v1910 = vadd.s32 %v1909, %v1907
        %v1911 = vand.u32 %v1778, 65535
        %v1912 = vshra.s32 %v1778, 16
        %v1913 = vcvt.s32.f32 %v1911
        %v1914 = vcvt.s32.f32 %v1912
        %1915 = vmin.xlane.f32.xlu0 %v1914
        %v1916 = vpop.xlane.xlu0 %1915
        %vm1917 = vcmp.eq.f32.partialorder %v1914, %v1916
        %v1918 = vsel %vm1917, %v1913, inf
        %1919 = vmin.xlane.f32.xlu0 %v1918
        %v1920 = vpop.xlane.xlu0 %1919
        %v1921 = vcvt.f32.s32 %v1920
        %v1922 = vcvt.f32.s32 %v1916
        %v1923 = vshll.u32 %v1922, 16
        %v1924 = vadd.s32 %v1923, %v1921
        %v1925 = vand.u32 %v1779, 65535
        %v1926 = vshra.s32 %v1779, 16
        %v1927 = vcvt.s32.f32 %v1925
        %v1928 = vcvt.s32.f32 %v1926
        %1929 = vmin.xlane.f32.xlu0 %v1928
        %v1930 = vpop.xlane.xlu0 %1929
        %vm1931 = vcmp.eq.f32.partialorder %v1928, %v1930
        %v1932 = vsel %vm1931, %v1927, inf
        %1933 = vmin.xlane.f32.xlu0 %v1932
        %v1934 = vpop.xlane.xlu0 %1933
        %v1935 = vcvt.f32.s32 %v1934
        %v1936 = vcvt.f32.s32 %v1930
        %v1937 = vshll.u32 %v1936, 16
        %v1938 = vadd.s32 %v1937, %v1935
        %v1939 = vand.u32 %v1780, 65535
        %v1940 = vshra.s32 %v1780, 16
        %v1941 = vcvt.s32.f32 %v1939
        %v1942 = vcvt.s32.f32 %v1940
        %1943 = vmin.xlane.f32.xlu0 %v1942
        %v1944 = vpop.xlane.xlu0 %1943
        %vm1945 = vcmp.eq.f32.partialorder %v1942, %v1944
        %v1946 = vsel %vm1945, %v1941, inf
        %1947 = vmin.xlane.f32.xlu0 %v1946
        %v1948 = vpop.xlane.xlu0 %1947
        %v1949 = vcvt.f32.s32 %v1948
        %v1950 = vcvt.f32.s32 %v1944
        %v1951 = vshll.u32 %v1950, 16
        %v1952 = vadd.s32 %v1951, %v1949
        %v1953 = vand.u32 %v1781, 65535
        %v1954 = vshra.s32 %v1781, 16
        %v1955 = vcvt.s32.f32 %v1953
        %v1956 = vcvt.s32.f32 %v1954
        %1957 = vmin.xlane.f32.xlu0 %v1956
        %v1958 = vpop.xlane.xlu0 %1957
        %vm1959 = vcmp.eq.f32.partialorder %v1956, %v1958
        %v1960 = vsel %vm1959, %v1955, inf
        %1961 = vmin.xlane.f32.xlu0 %v1960
        %v1962 = vpop.xlane.xlu0 %1961
        %v1963 = vcvt.f32.s32 %v1962
        %v1964 = vcvt.f32.s32 %v1958
        %v1965 = vshll.u32 %v1964, 16
        %v1966 = vadd.s32 %v1965, %v1963
        %v1967 = vand.u32 %v1782, 65535
        %v1968 = vshra.s32 %v1782, 16
        %v1969 = vcvt.s32.f32 %v1967
        %v1970 = vcvt.s32.f32 %v1968
        %1971 = vmin.xlane.f32.xlu0 %v1970
        %v1972 = vpop.xlane.xlu0 %1971
        %vm1973 = vcmp.eq.f32.partialorder %v1970, %v1972
        %v1974 = vsel %vm1973, %v1969, inf
        %1975 = vmin.xlane.f32.xlu0 %v1974
        %v1976 = vpop.xlane.xlu0 %1975
        %v1977 = vcvt.f32.s32 %v1976
        %v1978 = vcvt.f32.s32 %v1972
        %v1979 = vshll.u32 %v1978, 16
        %v1980 = vadd.s32 %v1979, %v1977
        %v1981 = vand.u32 %v1783, 65535
        %v1982 = vshra.s32 %v1783, 16
        %v1983 = vcvt.s32.f32 %v1981
        %v1984 = vcvt.s32.f32 %v1982
        %1985 = vmin.xlane.f32.xlu0 %v1984
        %v1986 = vpop.xlane.xlu0 %1985
        %vm1987 = vcmp.eq.f32.partialorder %v1984, %v1986
        %v1988 = vsel %vm1987, %v1983, inf
        %1989 = vmin.xlane.f32.xlu0 %v1988
        %v1990 = vpop.xlane.xlu0 %1989
        %v1991 = vcvt.f32.s32 %v1990
        %v1992 = vcvt.f32.s32 %v1986
        %v1993 = vshll.u32 %v1992, 16
        %v1994 = vadd.s32 %v1993, %v1991
        %v1995 = vand.u32 %v1784, 65535
        %v1996 = vshra.s32 %v1784, 16
        %v1997 = vcvt.s32.f32 %v1995
        %v1998 = vcvt.s32.f32 %v1996
        %1999 = vmin.xlane.f32.xlu0 %v1998
        %v2000 = vpop.xlane.xlu0 %1999
        %vm2001 = vcmp.eq.f32.partialorder %v1998, %v2000
        %v2002 = vsel %vm2001, %v1997, inf
        %2003 = vmin.xlane.f32.xlu0 %v2002
        %v2004 = vpop.xlane.xlu0 %2003
        %v2005 = vcvt.f32.s32 %v2004
        %v2006 = vcvt.f32.s32 %v2000
        %v2007 = vshll.u32 %v2006, 16
        %v2008 = vadd.s32 %v2007, %v2005
        %vm2009 = vcmp.eq.s32.totalorder %v440, %v1798
        %vm2010 = vcmp.eq.s32.totalorder %v440, %v1812
        %vm2011 = vcmp.eq.s32.totalorder %v440, %v1826
        %vm2012 = vcmp.eq.s32.totalorder %v440, %v1840
        %vm2013 = vcmp.eq.s32.totalorder %v440, %v1854
        %vm2014 = vcmp.eq.s32.totalorder %v440, %v1868
        %vm2015 = vcmp.eq.s32.totalorder %v440, %v1882
        %vm2016 = vcmp.eq.s32.totalorder %v440, %v1896
        %vm2017 = vcmp.eq.s32.totalorder %v440, %v1910
        %vm2018 = vcmp.eq.s32.totalorder %v440, %v1924
        %vm2019 = vcmp.eq.s32.totalorder %v440, %v1938
        %vm2020 = vcmp.eq.s32.totalorder %v440, %v1952
        %vm2021 = vcmp.eq.s32.totalorder %v440, %v1966
        %vm2022 = vcmp.eq.s32.totalorder %v440, %v1980
        %vm2023 = vcmp.eq.s32.totalorder %v440, %v1994
        %vm2024 = vcmp.eq.s32.totalorder %v440, %v2008
        %v2025 = vsel %vm2009, -inf, %v1705
        %v2026 = vsel %vm2010, -inf, %v1706
        %v2027 = vsel %vm2011, -inf, %v1707
        %v2028 = vsel %vm2012, -inf, %v1708
        %v2029 = vsel %vm2013, -inf, %v1709
        %v2030 = vsel %vm2014, -inf, %v1710
        %v2031 = vsel %vm2015, -inf, %v1711
        %v2032 = vsel %vm2016, -inf, %v1712
        %v2033 = vsel %vm2017, -inf, %v1713
        %v2034 = vsel %vm2018, -inf, %v1714
        %v2035 = vsel %vm2019, -inf, %v1715
        %v2036 = vsel %vm2020, -inf, %v1716
        %v2037 = vsel %vm2021, -inf, %v1717
        %v2038 = vsel %vm2022, -inf, %v1718
        %v2039 = vsel %vm2023, -inf, %v1719
        %v2040 = vsel %vm2024, -inf, %v1720
        %2041 = vmax.xlane.f32.xlu0 %v2025
        %v2042 = vpop.xlane.xlu0 %2041
        %2043 = vmax.xlane.f32.xlu0 %v2026
        %v2044 = vpop.xlane.xlu0 %2043
        %2045 = vmax.xlane.f32.xlu0 %v2027
        %v2046 = vpop.xlane.xlu0 %2045
        %2047 = vmax.xlane.f32.xlu0 %v2028
        %v2048 = vpop.xlane.xlu0 %2047
        %2049 = vmax.xlane.f32.xlu0 %v2029
        %v2050 = vpop.xlane.xlu0 %2049
        %2051 = vmax.xlane.f32.xlu0 %v2030
        %v2052 = vpop.xlane.xlu0 %2051
        %2053 = vmax.xlane.f32.xlu0 %v2031
        %v2054 = vpop.xlane.xlu0 %2053
        %2055 = vmax.xlane.f32.xlu0 %v2032
        %v2056 = vpop.xlane.xlu0 %2055
        %2057 = vmax.xlane.f32.xlu0 %v2033
        %v2058 = vpop.xlane.xlu0 %2057
        %2059 = vmax.xlane.f32.xlu0 %v2034
        %v2060 = vpop.xlane.xlu0 %2059
        %2061 = vmax.xlane.f32.xlu0 %v2035
        %v2062 = vpop.xlane.xlu0 %2061
        %2063 = vmax.xlane.f32.xlu0 %v2036
        %v2064 = vpop.xlane.xlu0 %2063
        %2065 = vmax.xlane.f32.xlu0 %v2037
        %v2066 = vpop.xlane.xlu0 %2065
        %2067 = vmax.xlane.f32.xlu0 %v2038
        %v2068 = vpop.xlane.xlu0 %2067
        %2069 = vmax.xlane.f32.xlu0 %v2039
        %v2070 = vpop.xlane.xlu0 %2069
        %2071 = vmax.xlane.f32.xlu0 %v2040
        %v2072 = vpop.xlane.xlu0 %2071
        %vm2073 = vcmp.ge.f32.partialorder %v377, %v2042
        %vm2074 = vcmp.ge.f32.partialorder %v380, %v2044
        %vm2075 = vcmp.ge.f32.partialorder %v385, %v2046
        %vm2076 = vcmp.ge.f32.partialorder %v388, %v2048
        %vm2077 = vcmp.ge.f32.partialorder %v393, %v2050
        %vm2078 = vcmp.ge.f32.partialorder %v396, %v2052
        %vm2079 = vcmp.ge.f32.partialorder %v401, %v2054
        %vm2080 = vcmp.ge.f32.partialorder %v404, %v2056
        %vm2081 = vcmp.ge.f32.partialorder %v409, %v2058
        %vm2082 = vcmp.ge.f32.partialorder %v412, %v2060
        %vm2083 = vcmp.ge.f32.partialorder %v417, %v2062
        %vm2084 = vcmp.ge.f32.partialorder %v420, %v2064
        %vm2085 = vcmp.ge.f32.partialorder %v425, %v2066
        %vm2086 = vcmp.ge.f32.partialorder %v428, %v2068
        %vm2087 = vcmp.ge.f32.partialorder %v433, %v2070
        %vm2088 = vcmp.ge.f32.partialorder %v436, %v2072
        %v2089 = vsel %vm2073, %v377, 0.0
        %v2090 = vsel %vm2074, %v380, 0.0
        %v2091 = vsel %vm2075, %v385, 0.0
        %v2092 = vsel %vm2076, %v388, 0.0
        %v2093 = vsel %vm2077, %v393, 0.0
        %v2094 = vsel %vm2078, %v396, 0.0
        %v2095 = vsel %vm2079, %v401, 0.0
        %v2096 = vsel %vm2080, %v404, 0.0
        %v2097 = vsel %vm2081, %v409, 0.0
        %v2098 = vsel %vm2082, %v412, 0.0
        %v2099 = vsel %vm2083, %v417, 0.0
        %v2100 = vsel %vm2084, %v420, 0.0
        %v2101 = vsel %vm2085, %v425, 0.0
        %v2102 = vsel %vm2086, %v428, 0.0
        %v2103 = vsel %vm2087, %v433, 0.0
        %v2104 = vsel %vm2088, %v436, 0.0
        %2105 = vst [vmem:[%s203] sm:$0xff] %v2089
        %2106 = vst [vmem:[%s203 + $0x8] sm:$0xff] %v2090
        %2107 = vst [vmem:[%s203 + $0x10] sm:$0xff] %v2091
        %2108 = vst [vmem:[%s203 + $0x18] sm:$0xff] %v2092
        %2109 = vst [vmem:[%s203 + $0x20] sm:$0xff] %v2093
        %2110 = vst [vmem:[%s203 + $0x28] sm:$0xff] %v2094
        %2111 = vst [vmem:[%s203 + $0x30] sm:$0xff] %v2095
        %2112 = vst [vmem:[%s203 + $0x38] sm:$0xff] %v2096
        %2113 = vst [vmem:[%s203 + $0x40] sm:$0xff] %v2097
        %2114 = vst [vmem:[%s203 + $0x48] sm:$0xff] %v2098
        %2115 = vst [vmem:[%s203 + $0x50] sm:$0xff] %v2099
        %2116 = vst [vmem:[%s203 + $0x58] sm:$0xff] %v2100
        %2117 = vst [vmem:[%s203 + $0x60] sm:$0xff] %v2101
        %2118 = vst [vmem:[%s203 + $0x68] sm:$0xff] %v2102
        %2119 = vst [vmem:[%s203 + $0x70] sm:$0xff] %v2103
        %2120 = vst [vmem:[%s203 + $0x78] sm:$0xff] %v2104
        %s2121 = sand.u32 %s97, 1
        %s2122 = scalar_lea.sflag [#allocation4], %s2121
        %s2123 = sand.u32 %s97, 1
        %s2124 = smul.addr %s2123, 128
        %s2125 = scalar_lea.vmem [#allocation7], %s2124
        // Predicated region
        $region41: #{tpu_custom_call.1} parent=31 // pred_check
          %p2126 = pneg %p107
        $region42: #{tpu_custom_call.1} parent=31 // pred_check_branch
          %2128 = sbr.rel (%p2126) target = $region44
        $region43: #{tpu_custom_call.1} parent=31 // pred_region
          %s2129 = smul.u32 16, %s21
          %s2131 = ssub.s32 2048, 2048
          %2132 = vsyncadd %s2122, %s2131
          %s2133 = smul.addr %s2129, 128
          %s2134 = scalar_lea.hbm %s3, %s2133
          %s2135 = sshll.u32 %s2125, 4
          %s2136 = int_to_ptr.vmem [resolvable:$true] %s2135
          %2141 = dma.vmem_to_hbm [thread:$0]  %s2136, 2048, %s2134, %s2122, 128, 128, 8
        $region44: #{tpu_custom_call.1} parent=31 // pred_fallthru
          _
      $region32: #{tpu_custom_call.1} parent=5 // pred_fallthru
        _
      %p2142 = scmp.le.s32.totalorder 2, %s16
      // Predicated region
      $region45: #{tpu_custom_call.1} parent=5 // pred_check
        %p2143 = pneg %p2142
      $region46: #{tpu_custom_call.1} parent=5 // pred_check_branch
        %2145 = sbr.rel (%p2143) target = $region48
      $region47: #{tpu_custom_call.1} parent=5 // pred_region
        %s2146 = ssub.s32 %s16, 2
        // Predicated region
        $region49: #{tpu_custom_call.1} parent=47 // pred_check
          %p2147 = pneg %p113
        $region50: #{tpu_custom_call.1} parent=47 // pred_check_branch
          %2149 = sbr.rel (%p2147) target = $region52
        $region51: #{tpu_custom_call.1} parent=47 // pred_region
          %s2150 = sand.u32 %s98, 1
          %s2151 = scalar_lea.sflag [#allocation4], %s2150
          %s2152 = sand.u32 %s98, 1
          %s2153 = smul.addr %s2152, 128
          %s2154 = scalar_lea.vmem [#allocation7], %s2153
          %2155 = dma.done %s2151, 2048
        $region52: #{tpu_custom_call.1} parent=47 // pred_fallthru
          _
      $region48: #{tpu_custom_call.1} parent=5 // pred_fallthru
        _
    $region6: #{tpu_custom_call.1} parent=1 // loop_footer
      %s20 = sadd.s32 1, %s16
    $region7: #{tpu_custom_call.1} parent=1 // loop_footer_branch
      %15 = sbr.rel target = $region3
    $region8: #{tpu_custom_call.1} parent=1 // loop_exit
      _
    %2156 = vsyncpa [#allocation3], 1
    %s2157 = scalar_lea.sflag [#allocation3], 1
    %2158 = vsyncpa %s2157, 1
    %2159 = vsyncpa [#allocation6], 1
    %2160 = vsyncpa [#allocation4], 1
    %s2161 = scalar_lea.sflag [#allocation4], 1
    %2162 = vsyncpa %s2161, 1

</llo_original>
